<compile_context>
chip_gen: v7x
topology: tpu7x:2x2x1
jax: 0.10.0
libtpu: 0.0.40
codegen_flags: <defaults>
</compile_context>

<pallas_src>
import jax
import jax.numpy as jnp
from jax.experimental import pallas as pl
from jax.experimental.pallas import tpu as pltpu

INPUT_DIM = 16
D_MODEL = 128
N_HEAD = 8
NUM_LAYERS = 2
D_FF = 256
FC_DIM = 64
PAD_FC = 128          # head padded to lane-dense width
LN_EPS = 1e-5


def _round_up(v, m):
    return ((v + m - 1) // m) * m


def transformer_kernel(x_ref, we_ref, be_ref,
                       wattn_ref, battn_ref, g1_ref, bt1_ref,
                       w1_ref, b1_ref, w2_ref, b2_ref, g2_ref, bt2_ref,
                       wfc_ref, bfc_ref, wout_ref, bout_ref, o_ref):
    # Constant ones/d matrix, hoisted once: LN reductions go through the MXU
    # (which has slack at these shapes) instead of the XLU, and the mean /
    # variance arrive already broadcast across all 128 lanes.
    ones_dd = jnp.full((D_MODEL, D_MODEL), 1.0 / D_MODEL, jnp.float32)

    def layer_norm(v, gamma, beta):
        mu = jnp.dot(v, ones_dd, preferred_element_type=jnp.float32)
        c = v - mu
        var = jnp.dot(c * c, ones_dd, preferred_element_type=jnp.float32)
        return c * jax.lax.rsqrt(var + LN_EPS) * gamma + beta

    def mm(a, w):
        # bf16 (or f32) MXU operands, f32 accumulation.
        return jnp.dot(a.astype(w.dtype), w, preferred_element_type=jnp.float32)

    x = x_ref[...]
    # embedding: (bb, input_dim) @ (input_dim, d_model)
    h = mm(x, we_ref[...]) + be_ref[...]

    num_layers = wattn_ref.shape[0]
    for l in range(num_layers):  # static unroll (2 layers)
        # self-attention at seq_len == 1 collapses to a single fused linear
        # (out_proj o V_proj); Q/K never affect the output so they were dropped.
        sa = mm(h, wattn_ref[l]) + battn_ref[l]
        h = layer_norm(h + sa, g1_ref[l], bt1_ref[l])
        # feed-forward block: linear1 -> relu -> (dropout=eval id) -> linear2
        ff = jnp.maximum(mm(h, w1_ref[l]) + b1_ref[l], 0.0)
        ff = mm(ff, w2_ref[l]) + b2_ref[l]
        h = layer_norm(h + ff, g2_ref[l], bt2_ref[l])

    # head: fc1 (lane-dense padded to 128) -> relu -> dropout(eval) -> out
    fc = jnp.maximum(mm(h, wfc_ref[...]) + bfc_ref[...], 0.0)
    # N=1 output matmul as VPU multiply + lane reduction; padded cols are 0.
    o_ref[...] = jnp.sum(fc * wout_ref[...], axis=-1, keepdims=True) + bout_ref[0]


def init_raw_params(key):
    """PyTorch-shaped parameters (deterministic, uniform init)."""
    keys = iter(jax.random.split(key, 64))

    def u(shape, bound):
        return jax.random.uniform(next(keys), shape, jnp.float32, -bound, bound)

    p = {
        "emb_w": u((D_MODEL, INPUT_DIM), INPUT_DIM ** -0.5),
        "emb_b": u((D_MODEL,), INPUT_DIM ** -0.5),
        "layers": [],
    }
    for _ in range(NUM_LAYERS):
        lp = {
            "in_proj_w": u((3 * D_MODEL, D_MODEL), D_MODEL ** -0.5),
            "in_proj_b": u((3 * D_MODEL,), D_MODEL ** -0.5),
            "out_proj_w": u((D_MODEL, D_MODEL), D_MODEL ** -0.5),
            "out_proj_b": u((D_MODEL,), D_MODEL ** -0.5),
            "lin1_w": u((D_FF, D_MODEL), D_MODEL ** -0.5),
            "lin1_b": u((D_FF,), D_MODEL ** -0.5),
            "lin2_w": u((D_MODEL, D_FF), D_FF ** -0.5),
            "lin2_b": u((D_MODEL,), D_FF ** -0.5),
            # non-trivial LN affine params so the kernel path is fully exercised
            "norm1_g": 1.0 + u((D_MODEL,), 0.1),
            "norm1_b": u((D_MODEL,), 0.1),
            "norm2_g": 1.0 + u((D_MODEL,), 0.1),
            "norm2_b": u((D_MODEL,), 0.1),
        }
        p["layers"].append(lp)
    p["fc1_w"] = u((FC_DIM, D_MODEL), D_MODEL ** -0.5)
    p["fc1_b"] = u((FC_DIM,), D_MODEL ** -0.5)
    p["out_w"] = u((1, FC_DIM), FC_DIM ** -0.5)
    p["out_b"] = u((1,), FC_DIM ** -0.5)
    return p


def pack_params(p, *, use_bf16=True):
    """Fold/stack PyTorch params into the kernel layout.

    Drops the dead Q/K slices, fuses V+out_proj into one matrix per layer,
    zero-pads the head to lane-dense width, and stores all matmul weights in
    bf16 (f32 accumulation in-kernel).  Biases / LN affine stay f32.
    """
    d = D_MODEL
    mdt = jnp.bfloat16 if use_bf16 else jnp.float32
    we = p["emb_w"].T.astype(mdt)                     # (input_dim, d_model)
    be = p["emb_b"].reshape(1, d)
    wattn, battn, g1, bt1, w1, b1, w2, b2, g2, bt2 = ([] for _ in range(10))
    for lp in p["layers"]:
        wv = lp["in_proj_w"][2 * d:3 * d]             # V slice; Q/K dead at seq_len=1
        bv = lp["in_proj_b"][2 * d:3 * d]
        wo, bo = lp["out_proj_w"], lp["out_proj_b"]
        wattn.append((wv.T @ wo.T).astype(mdt))       # fused attention matrix (d, d)
        battn.append((bv @ wo.T + bo).reshape(1, d))
        g1.append(lp["norm1_g"].reshape(1, d))
        bt1.append(lp["norm1_b"].reshape(1, d))
        w1.append(lp["lin1_w"].T.astype(mdt))         # (d, dff)
        b1.append(lp["lin1_b"].reshape(1, D_FF))
        w2.append(lp["lin2_w"].T.astype(mdt))         # (dff, d)
        b2.append(lp["lin2_b"].reshape(1, d))
        g2.append(lp["norm2_g"].reshape(1, d))
        bt2.append(lp["norm2_b"].reshape(1, d))
    st = lambda xs: jnp.stack(xs, axis=0)

    # lane-dense head: pad fc1 to 128 output columns, out to 128 input lanes.
    wfc = jnp.zeros((d, PAD_FC), jnp.float32).at[:, :FC_DIM].set(p["fc1_w"].T).astype(mdt)
    bfc = jnp.zeros((1, PAD_FC), jnp.float32).at[:, :FC_DIM].set(p["fc1_b"])
    wout = jnp.zeros((1, PAD_FC), jnp.float32).at[:, :FC_DIM].set(
        p["out_w"].reshape(1, FC_DIM))

    return (we, be, st(wattn), st(battn), st(g1), st(bt1),
            st(w1), st(b1), st(w2), st(b2), st(g2), st(bt2),
            wfc, bfc, wout, p["out_b"].reshape(1,))


def transformer_forward(x, params, *, block_b=1024):
    (we, be, wattn, battn, g1, bt1, w1, b1, w2, b2, g2, bt2,
     wfc, bfc, wout, bout) = params
    b, in_dim = x.shape

    # Batch block selection:
    #  * small batches: one block (per-step overhead would dominate splitting)
    #  * large batches: biggest block up to block_b, but guarantee >= 2 grid
    #    steps (multiple of 256 for full MXU M) so the "parallel" batch axis
    #    actually shards across both TensorCores on v7x.
    if b <= 256:
        bb = b
    else:
        bb = min(block_b, _round_up(pl.cdiv(b, 2), 256))
    grid = (pl.cdiv(b, bb),)

    def const_spec(a):
        nd = a.ndim
        return pl.BlockSpec(a.shape, lambda i, _n=nd: (0,) * _n)

    weights = (we, be, wattn, battn, g1, bt1, w1, b1, w2, b2, g2, bt2,
               wfc, bfc, wout)
    in_specs = ([pl.BlockSpec((bb, in_dim), lambda i: (i, 0))]
                + [const_spec(w) for w in weights]
                + [pl.BlockSpec(memory_space=pltpu.MemorySpace.SMEM)])
    out_spec = pl.BlockSpec((bb, 1), lambda i: (i, 0))

    # advisory cost estimate so XLA schedules surrounding ops sensibly
    flops_per_row = 2 * (INPUT_DIM * D_MODEL
                         + NUM_LAYERS * (D_MODEL * D_MODEL          # fused attn
                                         + 2 * D_MODEL * D_FF       # ff1 + ff2
                                         + 4 * D_MODEL * D_MODEL)   # LN MXU reduces
                         + D_MODEL * PAD_FC) + 2 * PAD_FC
    weight_bytes = sum(int(w.size) * w.dtype.itemsize for w in weights) + 4
    cost = pl.CostEstimate(
        flops=int(b) * int(flops_per_row),
        transcendentals=int(b) * 2 * NUM_LAYERS,          # rsqrt per LayerNorm row
        bytes_accessed=int(weight_bytes + x.size * x.dtype.itemsize + b * 4))

    return pl.pallas_call(
        transformer_kernel,
        out_shape=jax.ShapeDtypeStruct((b, 1), jnp.float32),
        grid=grid,
        in_specs=in_specs,
        out_specs=out_spec,
        compiler_params=pltpu.CompilerParams(
            dimension_semantics=("parallel",),
            vmem_limit_bytes=32 * 1024 * 1024),
        cost_estimate=cost,
    )(x, *weights, bout)


def reference_forward(x, p):
    """Pure-JAX reference with the FULL attention math (Q/K/softmax included)."""
    d, nh = D_MODEL, N_HEAD
    dh = d // nh

    def layer_norm(v, g, b):
        mu = v.mean(-1, keepdims=True)
        var = ((v - mu) ** 2).mean(-1, keepdims=True)
        return (v - mu) / jnp.sqrt(var + LN_EPS) * g + b

    y = x @ p["emb_w"].T + p["emb_b"]
    for lp in p["layers"]:
        q = y @ lp["in_proj_w"][:d].T + lp["in_proj_b"][:d]
        k = y @ lp["in_proj_w"][d:2 * d].T + lp["in_proj_b"][d:2 * d]
        v = y @ lp["in_proj_w"][2 * d:].T + lp["in_proj_b"][2 * d:]
        qh = q.reshape(-1, nh, dh)
        kh = k.reshape(-1, nh, dh)
        vh = v.reshape(-1, nh, dh)
        scores = (qh * kh).sum(-1, keepdims=True) / (dh ** 0.5)    # (B, nh, 1): one key
        attw = jax.nn.softmax(scores[..., None], axis=-1)[..., 0]  # == 1.0
        attn = (attw * vh).reshape(-1, d)
        sa = attn @ lp["out_proj_w"].T + lp["out_proj_b"]
        y = layer_norm(y + sa, lp["norm1_g"], lp["norm1_b"])
        ff = (jnp.maximum(y @ lp["lin1_w"].T + lp["lin1_b"], 0.0)
              @ lp["lin2_w"].T + lp["lin2_b"])
        y = layer_norm(y + ff, lp["norm2_g"], lp["norm2_b"])
    fc = jnp.maximum(y @ p["fc1_w"].T + p["fc1_b"], 0.0)
    return fc @ p["out_w"].T + p["out_b"]


if __name__ == "__main__":
    key = jax.random.PRNGKey(0)
    k_x, k_p = jax.random.split(key)
    x = jax.random.normal(k_x, (2, INPUT_DIM), jnp.float32)   # (batch=2, input_dim=16)
    raw = init_raw_params(k_p)

    ref = reference_forward(x, raw)

    # Exact-math path (f32 MXU operands): tight tolerance vs the full reference.
    out_f32 = jax.block_until_ready(
        transformer_forward(x, pack_params(raw, use_bf16=False)))
    assert out_f32.shape == (2, 1)
    assert jnp.allclose(out_f32, ref, atol=2e-3, rtol=2e-3), (out_f32, ref)

    # Default fast path (bf16 MXU operands, f32 accumulation / LN / residuals).
    out_bf16 = jax.block_until_ready(transformer_forward(x, pack_params(raw)))
    assert out_bf16.shape == (2, 1)
    assert jnp.allclose(out_bf16, ref, atol=5e-2, rtol=5e-2), (out_bf16, ref)

    print("KERNEL_OK")
</pallas_src>

<mosaic_0001>
module attributes {stable_mosaic.version = 11 : i64} {
  func.func @transformer_kernel(%arg0: i32, %arg1: memref<2x16xf32, #tpu.memory_space<vmem>>, %arg2: memref<16x128xf32, #tpu.memory_space<vmem>>, %arg3: memref<1x128xf32, #tpu.memory_space<vmem>>, %arg4: memref<2x128x128xf32, #tpu.memory_space<vmem>>, %arg5: memref<2x1x128xf32, #tpu.memory_space<vmem>>, %arg6: memref<2x1x128xf32, #tpu.memory_space<vmem>>, %arg7: memref<2x1x128xf32, #tpu.memory_space<vmem>>, %arg8: memref<2x128x256xf32, #tpu.memory_space<vmem>>, %arg9: memref<2x1x256xf32, #tpu.memory_space<vmem>>, %arg10: memref<2x256x128xf32, #tpu.memory_space<vmem>>, %arg11: memref<2x1x128xf32, #tpu.memory_space<vmem>>, %arg12: memref<2x1x128xf32, #tpu.memory_space<vmem>>, %arg13: memref<2x1x128xf32, #tpu.memory_space<vmem>>, %arg14: memref<128x128xf32, #tpu.memory_space<vmem>>, %arg15: memref<1x128xf32, #tpu.memory_space<vmem>>, %arg16: memref<1x128xf32, #tpu.memory_space<vmem>>, %arg17: memref<1xf32, #tpu.memory_space<smem>>, %arg18: memref<2x1xf32, #tpu.memory_space<vmem>>) attributes {dimension_semantics = [#tpu.dimension_semantics<parallel>], iteration_bounds = array<i64: 1>, scalar_prefetch = 0 : i64, scratch_operands = 0 : i64, tpu.core_type = #tpu.core_type<tc>, window_params = [{transform_indices = @transform_0, window_bounds = array<i64: 2, 16>}, {pipeline_mode = #tpu.pipeline_mode<synchronous>, transform_indices = @transform_1, window_bounds = array<i64: 16, 128>}, {pipeline_mode = #tpu.pipeline_mode<synchronous>, transform_indices = @transform_2, window_bounds = array<i64: 1, 128>}, {pipeline_mode = #tpu.pipeline_mode<synchronous>, transform_indices = @transform_3, window_bounds = array<i64: 2, 128, 128>}, {pipeline_mode = #tpu.pipeline_mode<synchronous>, transform_indices = @transform_4, window_bounds = array<i64: 2, 1, 128>}, {pipeline_mode = #tpu.pipeline_mode<synchronous>, transform_indices = @transform_5, window_bounds = array<i64: 2, 1, 128>}, {pipeline_mode = #tpu.pipeline_mode<synchronous>, transform_indices = @transform_6, window_bounds = array<i64: 2, 1, 128>}, {pipeline_mode = #tpu.pipeline_mode<synchronous>, transform_indices = @transform_7, window_bounds = array<i64: 2, 128, 256>}, {pipeline_mode = #tpu.pipeline_mode<synchronous>, transform_indices = @transform_8, window_bounds = array<i64: 2, 1, 256>}, {pipeline_mode = #tpu.pipeline_mode<synchronous>, transform_indices = @transform_9, window_bounds = array<i64: 2, 256, 128>}, {pipeline_mode = #tpu.pipeline_mode<synchronous>, transform_indices = @transform_10, window_bounds = array<i64: 2, 1, 128>}, {pipeline_mode = #tpu.pipeline_mode<synchronous>, transform_indices = @transform_11, window_bounds = array<i64: 2, 1, 128>}, {pipeline_mode = #tpu.pipeline_mode<synchronous>, transform_indices = @transform_12, window_bounds = array<i64: 2, 1, 128>}, {pipeline_mode = #tpu.pipeline_mode<synchronous>, transform_indices = @transform_13, window_bounds = array<i64: 128, 128>}, {pipeline_mode = #tpu.pipeline_mode<synchronous>, transform_indices = @transform_14, window_bounds = array<i64: 1, 128>}, {pipeline_mode = #tpu.pipeline_mode<synchronous>, transform_indices = @transform_15, window_bounds = array<i64: 1, 128>}, {transform_indices = @transform_16, window_bounds = array<i64: 1>}, {transform_indices = @transform_17, window_bounds = array<i64: 2, 1>}]} {
    %cst = arith.constant 7.812500e-03 : f32
    %0 = vector.broadcast %cst : f32 to vector<128x128xf32>
    %c0 = arith.constant 0 : index
    %c0_0 = arith.constant 0 : index
    %1 = vector.load %arg1[%c0, %c0_0] : memref<2x16xf32, #tpu.memory_space<vmem>>, vector<2x16xf32>
    %c0_1 = arith.constant 0 : index
    %c0_2 = arith.constant 0 : index
    %2 = vector.load %arg2[%c0_1, %c0_2] : memref<16x128xf32, #tpu.memory_space<vmem>>, vector<16x128xf32>
    %cst_3 = arith.constant dense<0.000000e+00> : vector<2x128xf32>
    %3 = tpu.matmul %1, %2, %cst_3 {dimension_numbers = #tpu.dot_dimension_numbers<[1], [0], [0], [1], [0, 0, 1, 1], [], []>} : vector<2x16xf32>, vector<16x128xf32>, vector<2x128xf32> -> vector<2x128xf32>
    %c0_4 = arith.constant 0 : index
    %c0_5 = arith.constant 0 : index
    %4 = vector.load %arg3[%c0_4, %c0_5] : memref<1x128xf32, #tpu.memory_space<vmem>>, vector<1x128xf32>
    %5 = vector.broadcast %4 : vector<1x128xf32> to vector<2x128xf32>
    %6 = arith.addf %3, %5 : vector<2x128xf32>
    %c0_6 = arith.constant 0 : index
    %c0_7 = arith.constant 0 : index
    %c0_8 = arith.constant 0 : index
    %7 = vector.load %arg4[%c0_6, %c0_7, %c0_8] : memref<2x128x128xf32, #tpu.memory_space<vmem>>, vector<1x128x128xf32>
    %8 = vector.shape_cast %7 : vector<1x128x128xf32> to vector<128x128xf32>
    %cst_9 = arith.constant dense<0.000000e+00> : vector<2x128xf32>
    %9 = tpu.matmul %6, %8, %cst_9 {dimension_numbers = #tpu.dot_dimension_numbers<[1], [0], [0], [1], [0, 0, 1, 1], [], []>} : vector<2x128xf32>, vector<128x128xf32>, vector<2x128xf32> -> vector<2x128xf32>
    %c0_10 = arith.constant 0 : index
    %c0_11 = arith.constant 0 : index
    %c0_12 = arith.constant 0 : index
    %10 = vector.load %arg5[%c0_10, %c0_11, %c0_12] : memref<2x1x128xf32, #tpu.memory_space<vmem>>, vector<1x1x128xf32>
    %11 = vector.shape_cast %10 : vector<1x1x128xf32> to vector<1x128xf32>
    %12 = vector.broadcast %11 : vector<1x128xf32> to vector<2x128xf32>
    %13 = arith.addf %9, %12 : vector<2x128xf32>
    %14 = arith.addf %6, %13 : vector<2x128xf32>
    %c0_13 = arith.constant 0 : index
    %c0_14 = arith.constant 0 : index
    %c0_15 = arith.constant 0 : index
    %15 = vector.load %arg6[%c0_13, %c0_14, %c0_15] : memref<2x1x128xf32, #tpu.memory_space<vmem>>, vector<1x1x128xf32>
    %16 = vector.shape_cast %15 : vector<1x1x128xf32> to vector<1x128xf32>
    %c0_16 = arith.constant 0 : index
    %c0_17 = arith.constant 0 : index
    %c0_18 = arith.constant 0 : index
    %17 = vector.load %arg7[%c0_16, %c0_17, %c0_18] : memref<2x1x128xf32, #tpu.memory_space<vmem>>, vector<1x1x128xf32>
    %18 = vector.shape_cast %17 : vector<1x1x128xf32> to vector<1x128xf32>
    %cst_19 = arith.constant dense<0.000000e+00> : vector<2x128xf32>
    %19 = tpu.matmul %14, %0, %cst_19 {dimension_numbers = #tpu.dot_dimension_numbers<[1], [0], [0], [1], [0, 0, 1, 1], [], []>} : vector<2x128xf32>, vector<128x128xf32>, vector<2x128xf32> -> vector<2x128xf32>
    %20 = arith.subf %14, %19 : vector<2x128xf32>
    %21 = arith.mulf %20, %20 : vector<2x128xf32>
    %cst_20 = arith.constant dense<0.000000e+00> : vector<2x128xf32>
    %22 = tpu.matmul %21, %0, %cst_20 {dimension_numbers = #tpu.dot_dimension_numbers<[1], [0], [0], [1], [0, 0, 1, 1], [], []>} : vector<2x128xf32>, vector<128x128xf32>, vector<2x128xf32> -> vector<2x128xf32>
    %cst_21 = arith.constant 9.99999974E-6 : f32
    %23 = vector.broadcast %cst_21 : f32 to vector<2x128xf32>
    %24 = arith.addf %22, %23 : vector<2x128xf32>
    %25 = math.rsqrt %24 : vector<2x128xf32>
    %26 = arith.mulf %20, %25 : vector<2x128xf32>
    %27 = vector.broadcast %16 : vector<1x128xf32> to vector<2x128xf32>
    %28 = arith.mulf %26, %27 : vector<2x128xf32>
    %29 = vector.broadcast %18 : vector<1x128xf32> to vector<2x128xf32>
    %30 = arith.addf %28, %29 : vector<2x128xf32>
    %c0_22 = arith.constant 0 : index
    %c0_23 = arith.constant 0 : index
    %c0_24 = arith.constant 0 : index
    %31 = vector.load %arg8[%c0_22, %c0_23, %c0_24] : memref<2x128x256xf32, #tpu.memory_space<vmem>>, vector<1x128x256xf32>
    %32 = vector.shape_cast %31 : vector<1x128x256xf32> to vector<128x256xf32>
    %cst_25 = arith.constant dense<0.000000e+00> : vector<2x256xf32>
    %33 = tpu.matmul %30, %32, %cst_25 {dimension_numbers = #tpu.dot_dimension_numbers<[1], [0], [0], [1], [0, 0, 1, 1], [], []>} : vector<2x128xf32>, vector<128x256xf32>, vector<2x256xf32> -> vector<2x256xf32>
    %c0_26 = arith.constant 0 : index
    %c0_27 = arith.constant 0 : index
    %c0_28 = arith.constant 0 : index
    %34 = vector.load %arg9[%c0_26, %c0_27, %c0_28] : memref<2x1x256xf32, #tpu.memory_space<vmem>>, vector<1x1x256xf32>
    %35 = vector.shape_cast %34 : vector<1x1x256xf32> to vector<1x256xf32>
    %36 = vector.broadcast %35 : vector<1x256xf32> to vector<2x256xf32>
    %37 = arith.addf %33, %36 : vector<2x256xf32>
    %cst_29 = arith.constant 0.000000e+00 : f32
    %38 = vector.broadcast %cst_29 : f32 to vector<2x256xf32>
    %39 = arith.maximumf %37, %38 : vector<2x256xf32>
    %c0_30 = arith.constant 0 : index
    %c0_31 = arith.constant 0 : index
    %c0_32 = arith.constant 0 : index
    %40 = vector.load %arg10[%c0_30, %c0_31, %c0_32] : memref<2x256x128xf32, #tpu.memory_space<vmem>>, vector<1x256x128xf32>
    %41 = vector.shape_cast %40 : vector<1x256x128xf32> to vector<256x128xf32>
    %cst_33 = arith.constant dense<0.000000e+00> : vector<2x128xf32>
    %42 = tpu.matmul %39, %41, %cst_33 {dimension_numbers = #tpu.dot_dimension_numbers<[1], [0], [0], [1], [0, 0, 1, 1], [], []>} : vector<2x256xf32>, vector<256x128xf32>, vector<2x128xf32> -> vector<2x128xf32>
    %c0_34 = arith.constant 0 : index
    %c0_35 = arith.constant 0 : index
    %c0_36 = arith.constant 0 : index
    %43 = vector.load %arg11[%c0_34, %c0_35, %c0_36] : memref<2x1x128xf32, #tpu.memory_space<vmem>>, vector<1x1x128xf32>
    %44 = vector.shape_cast %43 : vector<1x1x128xf32> to vector<1x128xf32>
    %45 = vector.broadcast %44 : vector<1x128xf32> to vector<2x128xf32>
    %46 = arith.addf %42, %45 : vector<2x128xf32>
    %47 = arith.addf %30, %46 : vector<2x128xf32>
    %c0_37 = arith.constant 0 : index
    %c0_38 = arith.constant 0 : index
    %c0_39 = arith.constant 0 : index
    %48 = vector.load %arg12[%c0_37, %c0_38, %c0_39] : memref<2x1x128xf32, #tpu.memory_space<vmem>>, vector<1x1x128xf32>
    %49 = vector.shape_cast %48 : vector<1x1x128xf32> to vector<1x128xf32>
    %c0_40 = arith.constant 0 : index
    %c0_41 = arith.constant 0 : index
    %c0_42 = arith.constant 0 : index
    %50 = vector.load %arg13[%c0_40, %c0_41, %c0_42] : memref<2x1x128xf32, #tpu.memory_space<vmem>>, vector<1x1x128xf32>
    %51 = vector.shape_cast %50 : vector<1x1x128xf32> to vector<1x128xf32>
    %cst_43 = arith.constant dense<0.000000e+00> : vector<2x128xf32>
    %52 = tpu.matmul %47, %0, %cst_43 {dimension_numbers = #tpu.dot_dimension_numbers<[1], [0], [0], [1], [0, 0, 1, 1], [], []>} : vector<2x128xf32>, vector<128x128xf32>, vector<2x128xf32> -> vector<2x128xf32>
    %53 = arith.subf %47, %52 : vector<2x128xf32>
    %54 = arith.mulf %53, %53 : vector<2x128xf32>
    %cst_44 = arith.constant dense<0.000000e+00> : vector<2x128xf32>
    %55 = tpu.matmul %54, %0, %cst_44 {dimension_numbers = #tpu.dot_dimension_numbers<[1], [0], [0], [1], [0, 0, 1, 1], [], []>} : vector<2x128xf32>, vector<128x128xf32>, vector<2x128xf32> -> vector<2x128xf32>
    %cst_45 = arith.constant 9.99999974E-6 : f32
    %56 = vector.broadcast %cst_45 : f32 to vector<2x128xf32>
    %57 = arith.addf %55, %56 : vector<2x128xf32>
    %58 = math.rsqrt %57 : vector<2x128xf32>
    %59 = arith.mulf %53, %58 : vector<2x128xf32>
    %60 = vector.broadcast %49 : vector<1x128xf32> to vector<2x128xf32>
    %61 = arith.mulf %59, %60 : vector<2x128xf32>
    %62 = vector.broadcast %51 : vector<1x128xf32> to vector<2x128xf32>
    %63 = arith.addf %61, %62 : vector<2x128xf32>
    %c1 = arith.constant 1 : index
    %c0_46 = arith.constant 0 : index
    %c0_47 = arith.constant 0 : index
    %64 = vector.load %arg4[%c1, %c0_46, %c0_47] : memref<2x128x128xf32, #tpu.memory_space<vmem>>, vector<1x128x128xf32>
    %65 = vector.shape_cast %64 : vector<1x128x128xf32> to vector<128x128xf32>
    %cst_48 = arith.constant dense<0.000000e+00> : vector<2x128xf32>
    %66 = tpu.matmul %63, %65, %cst_48 {dimension_numbers = #tpu.dot_dimension_numbers<[1], [0], [0], [1], [0, 0, 1, 1], [], []>} : vector<2x128xf32>, vector<128x128xf32>, vector<2x128xf32> -> vector<2x128xf32>
    %c1_49 = arith.constant 1 : index
    %c0_50 = arith.constant 0 : index
    %c0_51 = arith.constant 0 : index
    %67 = vector.load %arg5[%c1_49, %c0_50, %c0_51] : memref<2x1x128xf32, #tpu.memory_space<vmem>>, vector<1x1x128xf32>
    %68 = vector.shape_cast %67 : vector<1x1x128xf32> to vector<1x128xf32>
    %69 = vector.broadcast %68 : vector<1x128xf32> to vector<2x128xf32>
    %70 = arith.addf %66, %69 : vector<2x128xf32>
    %71 = arith.addf %63, %70 : vector<2x128xf32>
    %c1_52 = arith.constant 1 : index
    %c0_53 = arith.constant 0 : index
    %c0_54 = arith.constant 0 : index
    %72 = vector.load %arg6[%c1_52, %c0_53, %c0_54] : memref<2x1x128xf32, #tpu.memory_space<vmem>>, vector<1x1x128xf32>
    %73 = vector.shape_cast %72 : vector<1x1x128xf32> to vector<1x128xf32>
    %c1_55 = arith.constant 1 : index
    %c0_56 = arith.constant 0 : index
    %c0_57 = arith.constant 0 : index
    %74 = vector.load %arg7[%c1_55, %c0_56, %c0_57] : memref<2x1x128xf32, #tpu.memory_space<vmem>>, vector<1x1x128xf32>
    %75 = vector.shape_cast %74 : vector<1x1x128xf32> to vector<1x128xf32>
    %cst_58 = arith.constant dense<0.000000e+00> : vector<2x128xf32>
    %76 = tpu.matmul %71, %0, %cst_58 {dimension_numbers = #tpu.dot_dimension_numbers<[1], [0], [0], [1], [0, 0, 1, 1], [], []>} : vector<2x128xf32>, vector<128x128xf32>, vector<2x128xf32> -> vector<2x128xf32>
    %77 = arith.subf %71, %76 : vector<2x128xf32>
    %78 = arith.mulf %77, %77 : vector<2x128xf32>
    %cst_59 = arith.constant dense<0.000000e+00> : vector<2x128xf32>
    %79 = tpu.matmul %78, %0, %cst_59 {dimension_numbers = #tpu.dot_dimension_numbers<[1], [0], [0], [1], [0, 0, 1, 1], [], []>} : vector<2x128xf32>, vector<128x128xf32>, vector<2x128xf32> -> vector<2x128xf32>
    %cst_60 = arith.constant 9.99999974E-6 : f32
    %80 = vector.broadcast %cst_60 : f32 to vector<2x128xf32>
    %81 = arith.addf %79, %80 : vector<2x128xf32>
    %82 = math.rsqrt %81 : vector<2x128xf32>
    %83 = arith.mulf %77, %82 : vector<2x128xf32>
    %84 = vector.broadcast %73 : vector<1x128xf32> to vector<2x128xf32>
    %85 = arith.mulf %83, %84 : vector<2x128xf32>
    %86 = vector.broadcast %75 : vector<1x128xf32> to vector<2x128xf32>
    %87 = arith.addf %85, %86 : vector<2x128xf32>
    %c1_61 = arith.constant 1 : index
    %c0_62 = arith.constant 0 : index
    %c0_63 = arith.constant 0 : index
    %88 = vector.load %arg8[%c1_61, %c0_62, %c0_63] : memref<2x128x256xf32, #tpu.memory_space<vmem>>, vector<1x128x256xf32>
    %89 = vector.shape_cast %88 : vector<1x128x256xf32> to vector<128x256xf32>
    %cst_64 = arith.constant dense<0.000000e+00> : vector<2x256xf32>
    %90 = tpu.matmul %87, %89, %cst_64 {dimension_numbers = #tpu.dot_dimension_numbers<[1], [0], [0], [1], [0, 0, 1, 1], [], []>} : vector<2x128xf32>, vector<128x256xf32>, vector<2x256xf32> -> vector<2x256xf32>
    %c1_65 = arith.constant 1 : index
    %c0_66 = arith.constant 0 : index
    %c0_67 = arith.constant 0 : index
    %91 = vector.load %arg9[%c1_65, %c0_66, %c0_67] : memref<2x1x256xf32, #tpu.memory_space<vmem>>, vector<1x1x256xf32>
    %92 = vector.shape_cast %91 : vector<1x1x256xf32> to vector<1x256xf32>
    %93 = vector.broadcast %92 : vector<1x256xf32> to vector<2x256xf32>
    %94 = arith.addf %90, %93 : vector<2x256xf32>
    %cst_68 = arith.constant 0.000000e+00 : f32
    %95 = vector.broadcast %cst_68 : f32 to vector<2x256xf32>
    %96 = arith.maximumf %94, %95 : vector<2x256xf32>
    %c1_69 = arith.constant 1 : index
    %c0_70 = arith.constant 0 : index
    %c0_71 = arith.constant 0 : index
    %97 = vector.load %arg10[%c1_69, %c0_70, %c0_71] : memref<2x256x128xf32, #tpu.memory_space<vmem>>, vector<1x256x128xf32>
    %98 = vector.shape_cast %97 : vector<1x256x128xf32> to vector<256x128xf32>
    %cst_72 = arith.constant dense<0.000000e+00> : vector<2x128xf32>
    %99 = tpu.matmul %96, %98, %cst_72 {dimension_numbers = #tpu.dot_dimension_numbers<[1], [0], [0], [1], [0, 0, 1, 1], [], []>} : vector<2x256xf32>, vector<256x128xf32>, vector<2x128xf32> -> vector<2x128xf32>
    %c1_73 = arith.constant 1 : index
    %c0_74 = arith.constant 0 : index
    %c0_75 = arith.constant 0 : index
    %100 = vector.load %arg11[%c1_73, %c0_74, %c0_75] : memref<2x1x128xf32, #tpu.memory_space<vmem>>, vector<1x1x128xf32>
    %101 = vector.shape_cast %100 : vector<1x1x128xf32> to vector<1x128xf32>
    %102 = vector.broadcast %101 : vector<1x128xf32> to vector<2x128xf32>
    %103 = arith.addf %99, %102 : vector<2x128xf32>
    %104 = arith.addf %87, %103 : vector<2x128xf32>
    %c1_76 = arith.constant 1 : index
    %c0_77 = arith.constant 0 : index
    %c0_78 = arith.constant 0 : index
    %105 = vector.load %arg12[%c1_76, %c0_77, %c0_78] : memref<2x1x128xf32, #tpu.memory_space<vmem>>, vector<1x1x128xf32>
    %106 = vector.shape_cast %105 : vector<1x1x128xf32> to vector<1x128xf32>
    %c1_79 = arith.constant 1 : index
    %c0_80 = arith.constant 0 : index
    %c0_81 = arith.constant 0 : index
    %107 = vector.load %arg13[%c1_79, %c0_80, %c0_81] : memref<2x1x128xf32, #tpu.memory_space<vmem>>, vector<1x1x128xf32>
    %108 = vector.shape_cast %107 : vector<1x1x128xf32> to vector<1x128xf32>
    %cst_82 = arith.constant dense<0.000000e+00> : vector<2x128xf32>
    %109 = tpu.matmul %104, %0, %cst_82 {dimension_numbers = #tpu.dot_dimension_numbers<[1], [0], [0], [1], [0, 0, 1, 1], [], []>} : vector<2x128xf32>, vector<128x128xf32>, vector<2x128xf32> -> vector<2x128xf32>
    %110 = arith.subf %104, %109 : vector<2x128xf32>
    %111 = arith.mulf %110, %110 : vector<2x128xf32>
    %cst_83 = arith.constant dense<0.000000e+00> : vector<2x128xf32>
    %112 = tpu.matmul %111, %0, %cst_83 {dimension_numbers = #tpu.dot_dimension_numbers<[1], [0], [0], [1], [0, 0, 1, 1], [], []>} : vector<2x128xf32>, vector<128x128xf32>, vector<2x128xf32> -> vector<2x128xf32>
    %cst_84 = arith.constant 9.99999974E-6 : f32
    %113 = vector.broadcast %cst_84 : f32 to vector<2x128xf32>
    %114 = arith.addf %112, %113 : vector<2x128xf32>
    %115 = math.rsqrt %114 : vector<2x128xf32>
    %116 = arith.mulf %110, %115 : vector<2x128xf32>
    %117 = vector.broadcast %106 : vector<1x128xf32> to vector<2x128xf32>
    %118 = arith.mulf %116, %117 : vector<2x128xf32>
    %119 = vector.broadcast %108 : vector<1x128xf32> to vector<2x128xf32>
    %120 = arith.addf %118, %119 : vector<2x128xf32>
    %c0_85 = arith.constant 0 : index
    %c0_86 = arith.constant 0 : index
    %121 = vector.load %arg14[%c0_85, %c0_86] : memref<128x128xf32, #tpu.memory_space<vmem>>, vector<128x128xf32>
    %cst_87 = arith.constant dense<0.000000e+00> : vector<2x128xf32>
    %122 = tpu.matmul %120, %121, %cst_87 {dimension_numbers = #tpu.dot_dimension_numbers<[1], [0], [0], [1], [0, 0, 1, 1], [], []>} : vector<2x128xf32>, vector<128x128xf32>, vector<2x128xf32> -> vector<2x128xf32>
    %c0_88 = arith.constant 0 : index
    %c0_89 = arith.constant 0 : index
    %123 = vector.load %arg15[%c0_88, %c0_89] : memref<1x128xf32, #tpu.memory_space<vmem>>, vector<1x128xf32>
    %124 = vector.broadcast %123 : vector<1x128xf32> to vector<2x128xf32>
    %125 = arith.addf %122, %124 : vector<2x128xf32>
    %cst_90 = arith.constant 0.000000e+00 : f32
    %126 = vector.broadcast %cst_90 : f32 to vector<2x128xf32>
    %127 = arith.maximumf %125, %126 : vector<2x128xf32>
    %c0_91 = arith.constant 0 : index
    %c0_92 = arith.constant 0 : index
    %128 = vector.load %arg16[%c0_91, %c0_92] : memref<1x128xf32, #tpu.memory_space<vmem>>, vector<1x128xf32>
    %129 = vector.broadcast %128 : vector<1x128xf32> to vector<2x128xf32>
    %130 = arith.mulf %127, %129 : vector<2x128xf32>
    %cst_93 = arith.constant dense<0.000000e+00> : vector<2xf32>
    %131 = vector.multi_reduction <add>, %130, %cst_93 [1] : vector<2x128xf32> to vector<2xf32>
    %132 = vector.shape_cast %131 : vector<2xf32> to vector<2x1xf32>
    %c0_94 = arith.constant 0 : index
    %133 = memref.load %arg17[%c0_94] : memref<1xf32, #tpu.memory_space<smem>>
    %134 = vector.broadcast %133 : f32 to vector<2x1xf32>
    %135 = arith.addf %132, %134 : vector<2x1xf32>
    %c0_95 = arith.constant 0 : index
    %c0_96 = arith.constant 0 : index
    %136 = vector.load %arg18[%c0_95, %c0_96] : memref<2x1xf32, #tpu.memory_space<vmem>>, vector<2x1xf32>
    tpu.vector_store %arg18[%c0_95, %c0_96], %135 {strides = array<i32>} : memref<2x1xf32, #tpu.memory_space<vmem>>, vector<2x1xf32>,
    return
  }
  func.func @transform_0(%arg0: i32) -> (i32, i32) {
    %c0_i32 = arith.constant 0 : i32
    %c0_i32_0 = arith.constant 0 : i32
    return %arg0, %c0_i32 : i32, i32
  }
  func.func @transform_1(%arg0: i32) -> (i32, i32) {
    %c0_i32 = arith.constant 0 : i32
    %c0_i32_0 = arith.constant 0 : i32
    %c0_i32_1 = arith.constant 0 : i32
    return %c0_i32, %c0_i32_0 : i32, i32
  }
  func.func @transform_2(%arg0: i32) -> (i32, i32) {
    %c0_i32 = arith.constant 0 : i32
    %c0_i32_0 = arith.constant 0 : i32
    %c0_i32_1 = arith.constant 0 : i32
    return %c0_i32, %c0_i32_0 : i32, i32
  }
  func.func @transform_3(%arg0: i32) -> (i32, i32, i32) {
    %c0_i32 = arith.constant 0 : i32
    %c0_i32_0 = arith.constant 0 : i32
    %c0_i32_1 = arith.constant 0 : i32
    %c0_i32_2 = arith.constant 0 : i32
    return %c0_i32, %c0_i32_0, %c0_i32_1 : i32, i32, i32
  }
  func.func @transform_4(%arg0: i32) -> (i32, i32, i32) {
    %c0_i32 = arith.constant 0 : i32
    %c0_i32_0 = arith.constant 0 : i32
    %c0_i32_1 = arith.constant 0 : i32
    %c0_i32_2 = arith.constant 0 : i32
    return %c0_i32, %c0_i32_0, %c0_i32_1 : i32, i32, i32
  }
  func.func @transform_5(%arg0: i32) -> (i32, i32, i32) {
    %c0_i32 = arith.constant 0 : i32
    %c0_i32_0 = arith.constant 0 : i32
    %c0_i32_1 = arith.constant 0 : i32
    %c0_i32_2 = arith.constant 0 : i32
    return %c0_i32, %c0_i32_0, %c0_i32_1 : i32, i32, i32
  }
  func.func @transform_6(%arg0: i32) -> (i32, i32, i32) {
    %c0_i32 = arith.constant 0 : i32
    %c0_i32_0 = arith.constant 0 : i32
    %c0_i32_1 = arith.constant 0 : i32
    %c0_i32_2 = arith.constant 0 : i32
    return %c0_i32, %c0_i32_0, %c0_i32_1 : i32, i32, i32
  }
  func.func @transform_7(%arg0: i32) -> (i32, i32, i32) {
    %c0_i32 = arith.constant 0 : i32
    %c0_i32_0 = arith.constant 0 : i32
    %c0_i32_1 = arith.constant 0 : i32
    %c0_i32_2 = arith.constant 0 : i32
    return %c0_i32, %c0_i32_0, %c0_i32_1 : i32, i32, i32
  }
  func.func @transform_8(%arg0: i32) -> (i32, i32, i32) {
    %c0_i32 = arith.constant 0 : i32
    %c0_i32_0 = arith.constant 0 : i32
    %c0_i32_1 = arith.constant 0 : i32
    %c0_i32_2 = arith.constant 0 : i32
    return %c0_i32, %c0_i32_0, %c0_i32_1 : i32, i32, i32
  }
  func.func @transform_9(%arg0: i32) -> (i32, i32, i32) {
    %c0_i32 = arith.constant 0 : i32
    %c0_i32_0 = arith.constant 0 : i32
    %c0_i32_1 = arith.constant 0 : i32
    %c0_i32_2 = arith.constant 0 : i32
    return %c0_i32, %c0_i32_0, %c0_i32_1 : i32, i32, i32
  }
  func.func @transform_10(%arg0: i32) -> (i32, i32, i32) {
    %c0_i32 = arith.constant 0 : i32
    %c0_i32_0 = arith.constant 0 : i32
    %c0_i32_1 = arith.constant 0 : i32
    %c0_i32_2 = arith.constant 0 : i32
    return %c0_i32, %c0_i32_0, %c0_i32_1 : i32, i32, i32
  }
  func.func @transform_11(%arg0: i32) -> (i32, i32, i32) {
    %c0_i32 = arith.constant 0 : i32
    %c0_i32_0 = arith.constant 0 : i32
    %c0_i32_1 = arith.constant 0 : i32
    %c0_i32_2 = arith.constant 0 : i32
    return %c0_i32, %c0_i32_0, %c0_i32_1 : i32, i32, i32
  }
  func.func @transform_12(%arg0: i32) -> (i32, i32, i32) {
    %c0_i32 = arith.constant 0 : i32
    %c0_i32_0 = arith.constant 0 : i32
    %c0_i32_1 = arith.constant 0 : i32
    %c0_i32_2 = arith.constant 0 : i32
    return %c0_i32, %c0_i32_0, %c0_i32_1 : i32, i32, i32
  }
  func.func @transform_13(%arg0: i32) -> (i32, i32) {
    %c0_i32 = arith.constant 0 : i32
    %c0_i32_0 = arith.constant 0 : i32
    %c0_i32_1 = arith.constant 0 : i32
    return %c0_i32, %c0_i32_0 : i32, i32
  }
  func.func @transform_14(%arg0: i32) -> (i32, i32) {
    %c0_i32 = arith.constant 0 : i32
    %c0_i32_0 = arith.constant 0 : i32
    %c0_i32_1 = arith.constant 0 : i32
    return %c0_i32, %c0_i32_0 : i32, i32
  }
  func.func @transform_15(%arg0: i32) -> (i32, i32) {
    %c0_i32 = arith.constant 0 : i32
    %c0_i32_0 = arith.constant 0 : i32
    %c0_i32_1 = arith.constant 0 : i32
    return %c0_i32, %c0_i32_0 : i32, i32
  }
  func.func @transform_16(%arg0: i32) -> i32 {
    %c0_i32 = arith.constant 0 : i32
    %c0_i32_0 = arith.constant 0 : i32
    return %c0_i32 : i32
  }
  func.func @transform_17(%arg0: i32) -> (i32, i32) {
    %c0_i32 = arith.constant 0 : i32
    %c0_i32_0 = arith.constant 0 : i32
    return %arg0, %c0_i32 : i32, i32
  }
}

</mosaic_0001>

<llo_original>
// kernel: tpu_custom_call.1
$region0: #{tpu_custom_call.1}
  #allocation0 [shape = 'u32[]', space=smem, size = 0x4, offset = 0x4, fixed_abs, tag = 'smem constant byte address 0x4 - core index']
  #allocation1 [shape = 'u32[144,128]{1,0:T(1,128)}', space=vmem, size = 0x12000, scoped, tag = 'internal scratch']
  #allocation2 [shape = 'f32[1]{0:T(128)S(6)}', space=smem, size = 0x200, scoped, tag = 'scoped memory for tpu_custom_call.1']
  %s0 = inlined_call_operand.vmem [shape: f32[2,16], index: 0, kind: input, shape index: {}]
  %s1 = inlined_call_operand.hbm [shape: f32[16,128], index: 1, kind: input, shape index: {}]
  %s2 = inlined_call_operand.hbm [shape: f32[1,128], index: 2, kind: input, shape index: {}]
  %s3 = inlined_call_operand.hbm [shape: f32[2,128,128], index: 3, kind: input, shape index: {}]
  %s4 = inlined_call_operand.vmem [shape: f32[2,1,128], index: 4, kind: input, shape index: {}]
  %s5 = inlined_call_operand.vmem [shape: f32[2,1,128], index: 5, kind: input, shape index: {}]
  %s6 = inlined_call_operand.vmem [shape: f32[2,1,128], index: 6, kind: input, shape index: {}]
  %s7 = inlined_call_operand.hbm [shape: f32[2,128,256], index: 7, kind: input, shape index: {}]
  %s8 = inlined_call_operand.vmem [shape: f32[2,1,256], index: 8, kind: input, shape index: {}]
  %s9 = inlined_call_operand.hbm [shape: f32[2,256,128], index: 9, kind: input, shape index: {}]
  %s10 = inlined_call_operand.vmem [shape: f32[2,1,128], index: 10, kind: input, shape index: {}]
  %s11 = inlined_call_operand.vmem [shape: f32[2,1,128], index: 11, kind: input, shape index: {}]
  %s12 = inlined_call_operand.vmem [shape: f32[2,1,128], index: 12, kind: input, shape index: {}]
  %s13 = inlined_call_operand.hbm [shape: f32[128,128], index: 13, kind: input, shape index: {}]
  %s14 = inlined_call_operand.vmem [shape: f32[1,128], index: 14, kind: input, shape index: {}]
  %s15 = inlined_call_operand.vmem [shape: f32[1,128], index: 15, kind: input, shape index: {}]
  %s16 = inlined_call_operand.<no memory space> [shape: f32[1], index: 16, kind: input, shape index: {}]
  %s17 = inlined_call_operand.vmem [shape: f32[2,1], index: 17, kind: output, shape index: {}]
  %s18 = sld [smem:[#allocation0]]
  $region102: #{tpu_custom_call.1} parent=0
    _
  %s20 = ssub.s32 1, %s18
  %s21 = scalar_select 0, %s20, %s18
  %22 = sst [smem:[#allocation2]] %s16
  $region1: #{tpu_custom_call.1} parent=0
    #allocation3 [shape = 'u8[8192]{0}', space=vmem, size = 0x2000, scoped, tag = 'input window, operand 1, single buffered']
    #allocation4 [shape = 's32[1]{0}', space=sflag, size = 0x4, scoped, tag = 'scoped memory for tpu_custom_call.1']
    #allocation5 [shape = 'u8[512]{0}', space=vmem, size = 0x400, scoped, tag = 'input window, operand 2, single buffered']
    #allocation6 [shape = 's32[1]{0}', space=sflag, size = 0x4, scoped, tag = 'scoped memory for tpu_custom_call.1']
    #allocation7 [shape = 'u8[131072]{0}', space=vmem, size = 0x20000, scoped, tag = 'input window, operand 3, single buffered']
    #allocation8 [shape = 'u8[262144]{0}', space=vmem, size = 0x40000, scoped, tag = 'input window, operand 7, single buffered']
    #allocation9 [shape = 's32[1]{0}', space=sflag, size = 0x4, scoped, tag = 'scoped memory for tpu_custom_call.1']
    #allocation10 [shape = 'u8[262144]{0}', space=vmem, size = 0x40000, scoped, tag = 'input window, operand 9, single buffered']
    #allocation11 [shape = 'u8[65536]{0}', space=vmem, size = 0x10000, scoped, tag = 'input window, operand 13, single buffered']
    #allocation12 [shape = 's32[1]{0}', space=sflag, size = 0x4, scoped, tag = 'scoped memory for tpu_custom_call.1']
    %23 = vsyncpa [#allocation4], 0
    %24 = vsyncpa [#allocation6], 0
    %25 = vsyncpa [#allocation9], 0
    %26 = vsyncpa [#allocation12], 0
    // Predicated region
    $region2: #{tpu_custom_call.1} parent=1 // pred_check
      _
    $region3: #{tpu_custom_call.1} parent=1 // pred_check_branch
      %28 = sbr.rel (0) target = $region5
    $region4: #{tpu_custom_call.1} parent=1 // pred_region
      _
    $region5: #{tpu_custom_call.1} parent=1 // pred_fallthru
      _
    // Predicated region
    $region6: #{tpu_custom_call.1} parent=1 // pred_check
      _
    $region7: #{tpu_custom_call.1} parent=1 // pred_check_branch
      %30 = sbr.rel (0) target = $region9
    $region8: #{tpu_custom_call.1} parent=1 // pred_region
      %s32 = ssub.s32 256, 256
      %33 = vsyncadd [#allocation4], %s32
      %s34 = sshll.u32 [#allocation3], 4
      %s35 = int_to_ptr.vmem [resolvable:$true] %s34
      %40 = dma.hbm_to_vmem [thread:$0]  %s1, 256, %s35, [#allocation4], 128, 128, 8
    $region9: #{tpu_custom_call.1} parent=1 // pred_fallthru
      _
    // Predicated region
    $region10: #{tpu_custom_call.1} parent=1 // pred_check
      _
    $region11: #{tpu_custom_call.1} parent=1 // pred_check_branch
      %42 = sbr.rel (0) target = $region13
    $region12: #{tpu_custom_call.1} parent=1 // pred_region
      %s44 = ssub.s32 16, 16
      %45 = vsyncadd [#allocation6], %s44
      %s47 = sshll.u32 [#allocation5], 4
      %s48 = int_to_ptr.vmem [resolvable:$true] %s47
      %50 = dma.hbm_to_vmem [thread:$0]  %s2, 16, %s48, [#allocation6]
    $region13: #{tpu_custom_call.1} parent=1 // pred_fallthru
      _
    // Predicated region
    $region14: #{tpu_custom_call.1} parent=1 // pred_check
      _
    $region15: #{tpu_custom_call.1} parent=1 // pred_check_branch
      %52 = sbr.rel (0) target = $region17
    $region16: #{tpu_custom_call.1} parent=1 // pred_region
      %s54 = ssub.s32 4096, 4096
      %55 = vsyncadd [#allocation6], %s54
      %s56 = sshll.u32 [#allocation7], 4
      %s57 = int_to_ptr.vmem [resolvable:$true] %s56
      %62 = dma.hbm_to_vmem [thread:$0]  %s3, 4096, %s57, [#allocation6], 128, 128, 8
    $region17: #{tpu_custom_call.1} parent=1 // pred_fallthru
      _
    // Predicated region
    $region18: #{tpu_custom_call.1} parent=1 // pred_check
      _
    $region19: #{tpu_custom_call.1} parent=1 // pred_check_branch
      %64 = sbr.rel (0) target = $region21
    $region20: #{tpu_custom_call.1} parent=1 // pred_region
      _
    $region21: #{tpu_custom_call.1} parent=1 // pred_fallthru
      _
    // Predicated region
    $region22: #{tpu_custom_call.1} parent=1 // pred_check
      _
    $region23: #{tpu_custom_call.1} parent=1 // pred_check_branch
      %66 = sbr.rel (0) target = $region25
    $region24: #{tpu_custom_call.1} parent=1 // pred_region
      _
    $region25: #{tpu_custom_call.1} parent=1 // pred_fallthru
      _
    // Predicated region
    $region26: #{tpu_custom_call.1} parent=1 // pred_check
      _
    $region27: #{tpu_custom_call.1} parent=1 // pred_check_branch
      %68 = sbr.rel (0) target = $region29
    $region28: #{tpu_custom_call.1} parent=1 // pred_region
      _
    $region29: #{tpu_custom_call.1} parent=1 // pred_fallthru
      _
    // Predicated region
    $region30: #{tpu_custom_call.1} parent=1 // pred_check
      _
    $region31: #{tpu_custom_call.1} parent=1 // pred_check_branch
      %70 = sbr.rel (0) target = $region33
    $region32: #{tpu_custom_call.1} parent=1 // pred_region
      %s72 = ssub.s32 8192, 8192
      %73 = vsyncadd [#allocation9], %s72
      %s74 = sshll.u32 [#allocation8], 4
      %s75 = int_to_ptr.vmem [resolvable:$true] %s74
      %80 = dma.hbm_to_vmem [thread:$0]  %s7, 8192, %s75, [#allocation9], 256, 256, 16
    $region33: #{tpu_custom_call.1} parent=1 // pred_fallthru
      _
    // Predicated region
    $region34: #{tpu_custom_call.1} parent=1 // pred_check
      _
    $region35: #{tpu_custom_call.1} parent=1 // pred_check_branch
      %82 = sbr.rel (0) target = $region37
    $region36: #{tpu_custom_call.1} parent=1 // pred_region
      _
    $region37: #{tpu_custom_call.1} parent=1 // pred_fallthru
      _
    // Predicated region
    $region38: #{tpu_custom_call.1} parent=1 // pred_check
      _
    $region39: #{tpu_custom_call.1} parent=1 // pred_check_branch
      %84 = sbr.rel (0) target = $region41
    $region40: #{tpu_custom_call.1} parent=1 // pred_region
      %s86 = ssub.s32 8192, 8192
      %87 = vsyncadd [#allocation9], %s86
      %s88 = sshll.u32 [#allocation10], 4
      %s89 = int_to_ptr.vmem [resolvable:$true] %s88
      %94 = dma.hbm_to_vmem [thread:$0]  %s9, 8192, %s89, [#allocation9], 128, 128, 8
    $region41: #{tpu_custom_call.1} parent=1 // pred_fallthru
      _
    // Predicated region
    $region42: #{tpu_custom_call.1} parent=1 // pred_check
      _
    $region43: #{tpu_custom_call.1} parent=1 // pred_check_branch
      %96 = sbr.rel (0) target = $region45
    $region44: #{tpu_custom_call.1} parent=1 // pred_region
      _
    $region45: #{tpu_custom_call.1} parent=1 // pred_fallthru
      _
    // Predicated region
    $region46: #{tpu_custom_call.1} parent=1 // pred_check
      _
    $region47: #{tpu_custom_call.1} parent=1 // pred_check_branch
      %98 = sbr.rel (0) target = $region49
    $region48: #{tpu_custom_call.1} parent=1 // pred_region
      _
    $region49: #{tpu_custom_call.1} parent=1 // pred_fallthru
      _
    // Predicated region
    $region50: #{tpu_custom_call.1} parent=1 // pred_check
      _
    $region51: #{tpu_custom_call.1} parent=1 // pred_check_branch
      %100 = sbr.rel (0) target = $region53
    $region52: #{tpu_custom_call.1} parent=1 // pred_region
      _
    $region53: #{tpu_custom_call.1} parent=1 // pred_fallthru
      _
    // Predicated region
    $region54: #{tpu_custom_call.1} parent=1 // pred_check
      _
    $region55: #{tpu_custom_call.1} parent=1 // pred_check_branch
      %102 = sbr.rel (0) target = $region57
    $region56: #{tpu_custom_call.1} parent=1 // pred_region
      %s104 = ssub.s32 2048, 2048
      %105 = vsyncadd [#allocation12], %s104
      %s106 = sshll.u32 [#allocation11], 4
      %s107 = int_to_ptr.vmem [resolvable:$true] %s106
      %112 = dma.hbm_to_vmem [thread:$0]  %s13, 2048, %s107, [#allocation12], 128, 128, 8
    $region57: #{tpu_custom_call.1} parent=1 // pred_fallthru
      _
    // Predicated region
    $region58: #{tpu_custom_call.1} parent=1 // pred_check
      _
    $region59: #{tpu_custom_call.1} parent=1 // pred_check_branch
      %114 = sbr.rel (0) target = $region61
    $region60: #{tpu_custom_call.1} parent=1 // pred_region
      _
    $region61: #{tpu_custom_call.1} parent=1 // pred_fallthru
      _
    // Predicated region
    $region62: #{tpu_custom_call.1} parent=1 // pred_check
      _
    $region63: #{tpu_custom_call.1} parent=1 // pred_check_branch
      %116 = sbr.rel (0) target = $region65
    $region64: #{tpu_custom_call.1} parent=1 // pred_region
      _
    $region65: #{tpu_custom_call.1} parent=1 // pred_fallthru
      _
    // Predicated region
    $region66: #{tpu_custom_call.1} parent=1 // pred_check
      _
    $region67: #{tpu_custom_call.1} parent=1 // pred_check_branch
      %118 = sbr.rel (0) target = $region69
    $region68: #{tpu_custom_call.1} parent=1 // pred_region
      _
    $region69: #{tpu_custom_call.1} parent=1 // pred_fallthru
      _
    // Predicated region
    $region70: #{tpu_custom_call.1} parent=1 // pred_check
      _
    $region71: #{tpu_custom_call.1} parent=1 // pred_check_branch
      %120 = sbr.rel (0) target = $region73
    $region72: #{tpu_custom_call.1} parent=1 // pred_region
      %121 = dma.done [#allocation4], 256
    $region73: #{tpu_custom_call.1} parent=1 // pred_fallthru
      _
    // Predicated region
    $region74: #{tpu_custom_call.1} parent=1 // pred_check
      _
    $region75: #{tpu_custom_call.1} parent=1 // pred_check_branch
      %123 = sbr.rel (0) target = $region77
    $region76: #{tpu_custom_call.1} parent=1 // pred_region
      %124 = dma.done [#allocation6], 16
    $region77: #{tpu_custom_call.1} parent=1 // pred_fallthru
      _
    // Predicated region
    $region78: #{tpu_custom_call.1} parent=1 // pred_check
      _
    $region79: #{tpu_custom_call.1} parent=1 // pred_check_branch
      %126 = sbr.rel (0) target = $region81
    $region80: #{tpu_custom_call.1} parent=1 // pred_region
      %127 = dma.done [#allocation6], 4096
    $region81: #{tpu_custom_call.1} parent=1 // pred_fallthru
      _
    // Predicated region
    $region82: #{tpu_custom_call.1} parent=1 // pred_check
      _
    $region83: #{tpu_custom_call.1} parent=1 // pred_check_branch
      %129 = sbr.rel (0) target = $region85
    $region84: #{tpu_custom_call.1} parent=1 // pred_region
      %130 = dma.done [#allocation9], 8192
    $region85: #{tpu_custom_call.1} parent=1 // pred_fallthru
      _
    // Predicated region
    $region86: #{tpu_custom_call.1} parent=1 // pred_check
      _
    $region87: #{tpu_custom_call.1} parent=1 // pred_check_branch
      %132 = sbr.rel (0) target = $region89
    $region88: #{tpu_custom_call.1} parent=1 // pred_region
      %133 = dma.done [#allocation9], 8192
    $region89: #{tpu_custom_call.1} parent=1 // pred_fallthru
      _
    // Predicated region
    $region90: #{tpu_custom_call.1} parent=1 // pred_check
      _
    $region91: #{tpu_custom_call.1} parent=1 // pred_check_branch
      %135 = sbr.rel (0) target = $region93
    $region92: #{tpu_custom_call.1} parent=1 // pred_region
      %136 = dma.done [#allocation12], 2048
    $region93: #{tpu_custom_call.1} parent=1 // pred_fallthru
      _
    %v137 = vld [vmem:[%s0] sm:$0x3]
    %v138 = vld [vmem:[#allocation3] sm:$0xff]
    %v139 = vld [vmem:[#allocation3 + $0x8] sm:$0xff]
    %v140 = vld [vmem:[#allocation5] sm:$0x1]
    %v142 = vlaneseq
    %v143 = vshrl.u32 %v142, 7
    %v144 = vsub.s32 0, %v143
    %v145 = vrot.slane %v140, %v144
    %vm147 = vcmask 130048
    %v149 = vsel %vm147, %v137, 0
    %151 = vmatprep.subr.mxu0 0.0
    %152 = vmatpush1.msra.mxu0 %v138
    %153 = vmatprep.subr.mxu0 0.0
    %154 = vmatpush1.msra.mxu0 %v139
    %155 = vmatprep.subr.mxu0 0.0
    %156 = vmatpush1.msra.mxu0 0.0
    %157 = vmatprep.subr.mxu0 0.0
    %158 = vmatpush1.msra.mxu0 0.0
    %159 = vmatprep.subr.mxu0 0.0
    %160 = vmatpush1.msra.mxu0 0.0
    %161 = vmatprep.subr.mxu0 0.0
    %162 = vmatpush1.msra.mxu0 0.0
    %163 = vmatprep.subr.mxu0 0.0
    %164 = vmatpush1.msra.mxu0 0.0
    %165 = vmatprep.subr.mxu0 0.0
    %166 = vmatpush1.msra.mxu0 0.0
    %167 = vmatprep.subr.mxu0 0.0
    %168 = vmatpush1.msra.mxu0 0.0
    %169 = vmatprep.subr.mxu0 0.0
    %170 = vmatpush1.msra.mxu0 0.0
    %171 = vmatprep.subr.mxu0 0.0
    %172 = vmatpush1.msra.mxu0 0.0
    %173 = vmatprep.subr.mxu0 0.0
    %174 = vmatpush1.msra.mxu0 0.0
    %175 = vmatprep.subr.mxu0 0.0
    %176 = vmatpush1.msra.mxu0 0.0
    %177 = vmatprep.subr.mxu0 0.0
    %178 = vmatpush1.msra.mxu0 0.0
    %179 = vmatprep.subr.mxu0 0.0
    %180 = vmatpush1.msra.mxu0 0.0
    %181 = vmatprep.subr.mxu0 0.0
    %182 = vmatpush1.msra.mxu0 0.0
    %183 = vmatprep.subr.mxu0 0.0
    %184 = vmatpush1.msra.mxu0 0.0
    %185 = vmatprep.subr.mxu0 0.0
    %186 = vmatpush1.msra.mxu0 0.0
    %187 = vmatprep.subr.mxu0 0.0
    %188 = vmatpush1.msra.mxu0 0.0
    %189 = vmatprep.subr.mxu0 0.0
    %190 = vmatpush1.msra.mxu0 0.0
    %191 = vmatprep.subr.mxu0 0.0
    %192 = vmatpush1.msra.mxu0 0.0
    %193 = vmatprep.subr.mxu0 0.0
    %194 = vmatpush1.msra.mxu0 0.0
    %195 = vmatprep.subr.mxu0 0.0
    %196 = vmatpush1.msra.mxu0 0.0
    %197 = vmatprep.subr.mxu0 0.0
    %198 = vmatpush1.msra.mxu0 0.0
    %199 = vmatprep.subr.mxu0 0.0
    %200 = vmatpush1.msra.mxu0 0.0
    %201 = vmatprep.subr.mxu0 0.0
    %202 = vmatpush1.msra.mxu0 0.0
    %203 = vmatprep.subr.mxu0 0.0
    %204 = vmatpush1.msra.mxu0 0.0
    %205 = vmatprep.subr.mxu0 0.0
    %206 = vmatpush1.msra.mxu0 0.0
    %207 = vmatprep.subr.mxu0 0.0
    %208 = vmatpush1.msra.mxu0 0.0
    %209 = vmatprep.subr.mxu0 0.0
    %210 = vmatpush1.msra.mxu0 0.0
    %211 = vmatprep.subr.mxu0 0.0
    %212 = vmatpush1.msra.mxu0 0.0
    %213 = vmatprep.subr.mxu0 0.0
    %214 = vmatpush1.msra.mxu0 0.0
    %215 = vmatprep.mubr.f32.mxu0 0.0
    %216 = vmatmul.mubr.f32.gmra.mrb[0].mxu0 %v149
    %v217 = vpop.f32.mrb[0].mxu0
    %v218 = vadd.f32 %v145, %v217
    %v219 = vpop.f32.mrb[0].mxu0
    %220 = vdwg.mxu0
    %v221 = vld [vmem:[#allocation7] sm:$0xff]
    %v222 = vld [vmem:[#allocation7 + $0x8] sm:$0xff]
    %v223 = vld [vmem:[#allocation7 + $0x10] sm:$0xff]
    %v224 = vld [vmem:[#allocation7 + $0x18] sm:$0xff]
    %v225 = vld [vmem:[#allocation7 + $0x20] sm:$0xff]
    %v226 = vld [vmem:[#allocation7 + $0x28] sm:$0xff]
    %v227 = vld [vmem:[#allocation7 + $0x30] sm:$0xff]
    %v228 = vld [vmem:[#allocation7 + $0x38] sm:$0xff]
    %v229 = vld [vmem:[#allocation7 + $0x40] sm:$0xff]
    %v230 = vld [vmem:[#allocation7 + $0x48] sm:$0xff]
    %v231 = vld [vmem:[#allocation7 + $0x50] sm:$0xff]
    %v232 = vld [vmem:[#allocation7 + $0x58] sm:$0xff]
    %v233 = vld [vmem:[#allocation7 + $0x60] sm:$0xff]
    %v234 = vld [vmem:[#allocation7 + $0x68] sm:$0xff]
    %v235 = vld [vmem:[#allocation7 + $0x70] sm:$0xff]
    %v236 = vld [vmem:[#allocation7 + $0x78] sm:$0xff]
    %v237 = vld [vmem:[%s4] sm:$0x1]
    %v239 = vlaneseq
    %v240 = vshrl.u32 %v239, 7
    %v241 = vsub.s32 0, %v240
    %v242 = vrot.slane %v237, %v241
    %244 = vmatprep.subr.mxu0 0.0
    %245 = vmatpush1.msra.mxu0 %v221
    %246 = vmatprep.subr.mxu0 0.0
    %247 = vmatpush1.msra.mxu0 %v222
    %248 = vmatprep.subr.mxu0 0.0
    %249 = vmatpush1.msra.mxu0 %v223
    %250 = vmatprep.subr.mxu0 0.0
    %251 = vmatpush1.msra.mxu0 %v224
    %252 = vmatprep.subr.mxu0 0.0
    %253 = vmatpush1.msra.mxu0 %v225
    %254 = vmatprep.subr.mxu0 0.0
    %255 = vmatpush1.msra.mxu0 %v226
    %256 = vmatprep.subr.mxu0 0.0
    %257 = vmatpush1.msra.mxu0 %v227
    %258 = vmatprep.subr.mxu0 0.0
    %259 = vmatpush1.msra.mxu0 %v228
    %260 = vmatprep.subr.mxu0 0.0
    %261 = vmatpush1.msra.mxu0 %v229
    %262 = vmatprep.subr.mxu0 0.0
    %263 = vmatpush1.msra.mxu0 %v230
    %264 = vmatprep.subr.mxu0 0.0
    %265 = vmatpush1.msra.mxu0 %v231
    %266 = vmatprep.subr.mxu0 0.0
    %267 = vmatpush1.msra.mxu0 %v232
    %268 = vmatprep.subr.mxu0 0.0
    %269 = vmatpush1.msra.mxu0 %v233
    %270 = vmatprep.subr.mxu0 0.0
    %271 = vmatpush1.msra.mxu0 %v234
    %272 = vmatprep.subr.mxu0 0.0
    %273 = vmatpush1.msra.mxu0 %v235
    %274 = vmatprep.subr.mxu0 0.0
    %275 = vmatpush1.msra.mxu0 %v236
    %276 = vmatprep.subr.mxu0 0.0
    %277 = vmatpush1.msra.mxu0 0.0
    %278 = vmatprep.subr.mxu0 0.0
    %279 = vmatpush1.msra.mxu0 0.0
    %280 = vmatprep.subr.mxu0 0.0
    %281 = vmatpush1.msra.mxu0 0.0
    %282 = vmatprep.subr.mxu0 0.0
    %283 = vmatpush1.msra.mxu0 0.0
    %284 = vmatprep.subr.mxu0 0.0
    %285 = vmatpush1.msra.mxu0 0.0
    %286 = vmatprep.subr.mxu0 0.0
    %287 = vmatpush1.msra.mxu0 0.0
    %288 = vmatprep.subr.mxu0 0.0
    %289 = vmatpush1.msra.mxu0 0.0
    %290 = vmatprep.subr.mxu0 0.0
    %291 = vmatpush1.msra.mxu0 0.0
    %292 = vmatprep.subr.mxu0 0.0
    %293 = vmatpush1.msra.mxu0 0.0
    %294 = vmatprep.subr.mxu0 0.0
    %295 = vmatpush1.msra.mxu0 0.0
    %296 = vmatprep.subr.mxu0 0.0
    %297 = vmatpush1.msra.mxu0 0.0
    %298 = vmatprep.subr.mxu0 0.0
    %299 = vmatpush1.msra.mxu0 0.0
    %300 = vmatprep.subr.mxu0 0.0
    %301 = vmatpush1.msra.mxu0 0.0
    %302 = vmatprep.subr.mxu0 0.0
    %303 = vmatpush1.msra.mxu0 0.0
    %304 = vmatprep.subr.mxu0 0.0
    %305 = vmatpush1.msra.mxu0 0.0
    %306 = vmatprep.subr.mxu0 0.0
    %307 = vmatpush1.msra.mxu0 0.0
    %308 = vmatprep.mubr.f32.mxu0 0.0
    %309 = vmatmul.mubr.f32.gmra.mrb[0].mxu0 %v218
    %v310 = vpop.f32.mrb[0].mxu0
    %v311 = vadd.f32 %v242, %v310
    %v312 = vpop.f32.mrb[0].mxu0
    %313 = vdwg.mxu0
    %v314 = vadd.f32 %v218, %v311
    %v315 = vld [vmem:[%s5] sm:$0x1]
    %v316 = vld [vmem:[%s6] sm:$0x1]
    %317 = vmatprep.subr.mxu0 0.0
    %318 = vmatpush1.msra.mxu0 0.0078125
    %319 = vmatprep.subr.mxu0 0.0
    %320 = vmatpush1.msra.mxu0 0.0078125
    %321 = vmatprep.subr.mxu0 0.0
    %322 = vmatpush1.msra.mxu0 0.0078125
    %323 = vmatprep.subr.mxu0 0.0
    %324 = vmatpush1.msra.mxu0 0.0078125
    %325 = vmatprep.subr.mxu0 0.0
    %326 = vmatpush1.msra.mxu0 0.0078125
    %327 = vmatprep.subr.mxu0 0.0
    %328 = vmatpush1.msra.mxu0 0.0078125
    %329 = vmatprep.subr.mxu0 0.0
    %330 = vmatpush1.msra.mxu0 0.0078125
    %331 = vmatprep.subr.mxu0 0.0
    %332 = vmatpush1.msra.mxu0 0.0078125
    %333 = vmatprep.subr.mxu0 0.0
    %334 = vmatpush1.msra.mxu0 0.0078125
    %335 = vmatprep.subr.mxu0 0.0
    %336 = vmatpush1.msra.mxu0 0.0078125
    %337 = vmatprep.subr.mxu0 0.0
    %338 = vmatpush1.msra.mxu0 0.0078125
    %339 = vmatprep.subr.mxu0 0.0
    %340 = vmatpush1.msra.mxu0 0.0078125
    %341 = vmatprep.subr.mxu0 0.0
    %342 = vmatpush1.msra.mxu0 0.0078125
    %343 = vmatprep.subr.mxu0 0.0
    %344 = vmatpush1.msra.mxu0 0.0078125
    %345 = vmatprep.subr.mxu0 0.0
    %346 = vmatpush1.msra.mxu0 0.0078125
    %347 = vmatprep.subr.mxu0 0.0
    %348 = vmatpush1.msra.mxu0 0.0078125
    %349 = vmatprep.subr.mxu0 0.0
    %350 = vmatpush1.msra.mxu0 0.0
    %351 = vmatprep.subr.mxu0 0.0
    %352 = vmatpush1.msra.mxu0 0.0
    %353 = vmatprep.subr.mxu0 0.0
    %354 = vmatpush1.msra.mxu0 0.0
    %355 = vmatprep.subr.mxu0 0.0
    %356 = vmatpush1.msra.mxu0 0.0
    %357 = vmatprep.subr.mxu0 0.0
    %358 = vmatpush1.msra.mxu0 0.0
    %359 = vmatprep.subr.mxu0 0.0
    %360 = vmatpush1.msra.mxu0 0.0
    %361 = vmatprep.subr.mxu0 0.0
    %362 = vmatpush1.msra.mxu0 0.0
    %363 = vmatprep.subr.mxu0 0.0
    %364 = vmatpush1.msra.mxu0 0.0
    %365 = vmatprep.subr.mxu0 0.0
    %366 = vmatpush1.msra.mxu0 0.0
    %367 = vmatprep.subr.mxu0 0.0
    %368 = vmatpush1.msra.mxu0 0.0
    %369 = vmatprep.subr.mxu0 0.0
    %370 = vmatpush1.msra.mxu0 0.0
    %371 = vmatprep.subr.mxu0 0.0
    %372 = vmatpush1.msra.mxu0 0.0
    %373 = vmatprep.subr.mxu0 0.0
    %374 = vmatpush1.msra.mxu0 0.0
    %375 = vmatprep.subr.mxu0 0.0
    %376 = vmatpush1.msra.mxu0 0.0
    %377 = vmatprep.subr.mxu0 0.0
    %378 = vmatpush1.msra.mxu0 0.0
    %379 = vmatprep.subr.mxu0 0.0
    %380 = vmatpush1.msra.mxu0 0.0
    %381 = vmatprep.mubr.f32.mxu0 0.0
    %382 = vmatmul.mubr.f32.gmra.mrb[0].mxu0 %v314
    %v383 = vpop.f32.mrb[0].mxu0
    %v384 = vadd.f32 0.0, %v383
    %v385 = vpop.f32.mrb[0].mxu0
    %386 = vdwg.mxu0
    %v387 = vsub.f32 %v314, %v384
    %v388 = vmul.f32 %v387, %v387
    %389 = vmatprep.subr.mxu0 0.0
    %390 = vmatpush1.msra.mxu0 0.0078125
    %391 = vmatprep.subr.mxu0 0.0
    %392 = vmatpush1.msra.mxu0 0.0078125
    %393 = vmatprep.subr.mxu0 0.0
    %394 = vmatpush1.msra.mxu0 0.0078125
    %395 = vmatprep.subr.mxu0 0.0
    %396 = vmatpush1.msra.mxu0 0.0078125
    %397 = vmatprep.subr.mxu0 0.0
    %398 = vmatpush1.msra.mxu0 0.0078125
    %399 = vmatprep.subr.mxu0 0.0
    %400 = vmatpush1.msra.mxu0 0.0078125
    %401 = vmatprep.subr.mxu0 0.0
    %402 = vmatpush1.msra.mxu0 0.0078125
    %403 = vmatprep.subr.mxu0 0.0
    %404 = vmatpush1.msra.mxu0 0.0078125
    %405 = vmatprep.subr.mxu0 0.0
    %406 = vmatpush1.msra.mxu0 0.0078125
    %407 = vmatprep.subr.mxu0 0.0
    %408 = vmatpush1.msra.mxu0 0.0078125
    %409 = vmatprep.subr.mxu0 0.0
    %410 = vmatpush1.msra.mxu0 0.0078125
    %411 = vmatprep.subr.mxu0 0.0
    %412 = vmatpush1.msra.mxu0 0.0078125
    %413 = vmatprep.subr.mxu0 0.0
    %414 = vmatpush1.msra.mxu0 0.0078125
    %415 = vmatprep.subr.mxu0 0.0
    %416 = vmatpush1.msra.mxu0 0.0078125
    %417 = vmatprep.subr.mxu0 0.0
    %418 = vmatpush1.msra.mxu0 0.0078125
    %419 = vmatprep.subr.mxu0 0.0
    %420 = vmatpush1.msra.mxu0 0.0078125
    %421 = vmatprep.subr.mxu0 0.0
    %422 = vmatpush1.msra.mxu0 0.0
    %423 = vmatprep.subr.mxu0 0.0
    %424 = vmatpush1.msra.mxu0 0.0
    %425 = vmatprep.subr.mxu0 0.0
    %426 = vmatpush1.msra.mxu0 0.0
    %427 = vmatprep.subr.mxu0 0.0
    %428 = vmatpush1.msra.mxu0 0.0
    %429 = vmatprep.subr.mxu0 0.0
    %430 = vmatpush1.msra.mxu0 0.0
    %431 = vmatprep.subr.mxu0 0.0
    %432 = vmatpush1.msra.mxu0 0.0
    %433 = vmatprep.subr.mxu0 0.0
    %434 = vmatpush1.msra.mxu0 0.0
    %435 = vmatprep.subr.mxu0 0.0
    %436 = vmatpush1.msra.mxu0 0.0
    %437 = vmatprep.subr.mxu0 0.0
    %438 = vmatpush1.msra.mxu0 0.0
    %439 = vmatprep.subr.mxu0 0.0
    %440 = vmatpush1.msra.mxu0 0.0
    %441 = vmatprep.subr.mxu0 0.0
    %442 = vmatpush1.msra.mxu0 0.0
    %443 = vmatprep.subr.mxu0 0.0
    %444 = vmatpush1.msra.mxu0 0.0
    %445 = vmatprep.subr.mxu0 0.0
    %446 = vmatpush1.msra.mxu0 0.0
    %447 = vmatprep.subr.mxu0 0.0
    %448 = vmatpush1.msra.mxu0 0.0
    %449 = vmatprep.subr.mxu0 0.0
    %450 = vmatpush1.msra.mxu0 0.0
    %451 = vmatprep.subr.mxu0 0.0
    %452 = vmatpush1.msra.mxu0 0.0
    %453 = vmatprep.mubr.f32.mxu0 0.0
    %454 = vmatmul.mubr.f32.gmra.mrb[0].mxu0 %v388
    %v455 = vpop.f32.mrb[0].mxu0
    %v456 = vadd.f32 1e-05, %v455
    %v457 = vpop.f32.mrb[0].mxu0
    %458 = vdwg.mxu0
    %v459 = vrsqrt.pop %v456
    %v460 = vmul.f32 %v387, %v459
    %v462 = vlaneseq
    %v463 = vshrl.u32 %v462, 7
    %v464 = vsub.s32 0, %v463
    %v465 = vrot.slane %v315, %v464
    %v467 = vmul.f32 %v460, %v465
    %v469 = vlaneseq
    %v470 = vshrl.u32 %v469, 7
    %v471 = vsub.s32 0, %v470
    %v472 = vrot.slane %v316, %v471
    %v474 = vadd.f32 %v467, %v472
    %v475 = vld [vmem:[#allocation8] sm:$0xff]
    %v476 = vld [vmem:[#allocation8 + $0x8] sm:$0xff]
    %v477 = vld [vmem:[#allocation8 + $0x10] sm:$0xff]
    %v478 = vld [vmem:[#allocation8 + $0x18] sm:$0xff]
    %v479 = vld [vmem:[#allocation8 + $0x20] sm:$0xff]
    %v480 = vld [vmem:[#allocation8 + $0x28] sm:$0xff]
    %v481 = vld [vmem:[#allocation8 + $0x30] sm:$0xff]
    %v482 = vld [vmem:[#allocation8 + $0x38] sm:$0xff]
    %v483 = vld [vmem:[#allocation8 + $0x40] sm:$0xff]
    %v484 = vld [vmem:[#allocation8 + $0x48] sm:$0xff]
    %v485 = vld [vmem:[#allocation8 + $0x50] sm:$0xff]
    %v486 = vld [vmem:[#allocation8 + $0x58] sm:$0xff]
    %v487 = vld [vmem:[#allocation8 + $0x60] sm:$0xff]
    %v488 = vld [vmem:[#allocation8 + $0x68] sm:$0xff]
    %v489 = vld [vmem:[#allocation8 + $0x70] sm:$0xff]
    %v490 = vld [vmem:[#allocation8 + $0x78] sm:$0xff]
    %v491 = vld [vmem:[#allocation8 + $0x80] sm:$0xff]
    %v492 = vld [vmem:[#allocation8 + $0x88] sm:$0xff]
    %v493 = vld [vmem:[#allocation8 + $0x90] sm:$0xff]
    %v494 = vld [vmem:[#allocation8 + $0x98] sm:$0xff]
    %v495 = vld [vmem:[#allocation8 + $0xa0] sm:$0xff]
    %v496 = vld [vmem:[#allocation8 + $0xa8] sm:$0xff]
    %v497 = vld [vmem:[#allocation8 + $0xb0] sm:$0xff]
    %v498 = vld [vmem:[#allocation8 + $0xb8] sm:$0xff]
    %v499 = vld [vmem:[#allocation8 + $0xc0] sm:$0xff]
    %v500 = vld [vmem:[#allocation8 + $0xc8] sm:$0xff]
    %v501 = vld [vmem:[#allocation8 + $0xd0] sm:$0xff]
    %v502 = vld [vmem:[#allocation8 + $0xd8] sm:$0xff]
    %v503 = vld [vmem:[#allocation8 + $0xe0] sm:$0xff]
    %v504 = vld [vmem:[#allocation8 + $0xe8] sm:$0xff]
    %v505 = vld [vmem:[#allocation8 + $0xf0] sm:$0xff]
    %v506 = vld [vmem:[#allocation8 + $0xf8] sm:$0xff]
    %v507 = vld [vmem:[%s8] sm:$0x3]
    %v509 = vlaneseq
    %v510 = vshrl.u32 %v509, 7
    %v511 = vsub.s32 0, %v510
    %v512 = vrot.slane %v507, %v511
    %v513 = vlaneseq
    %v514 = vshrl.u32 %v513, 7
    %v515 = vsub.s32 1, %v514
    %v516 = vrot.slane %v507, %v515
    %519 = vmatprep.subr.mxu0 %v476
    %520 = vmatpush1.msra.mxu0 %v475
    %521 = vmatprep.subr.mxu0 %v478
    %522 = vmatpush1.msra.mxu0 %v477
    %523 = vmatprep.subr.mxu0 %v480
    %524 = vmatpush1.msra.mxu0 %v479
    %525 = vmatprep.subr.mxu0 %v482
    %526 = vmatpush1.msra.mxu0 %v481
    %527 = vmatprep.subr.mxu0 %v484
    %528 = vmatpush1.msra.mxu0 %v483
    %529 = vmatprep.subr.mxu0 %v486
    %530 = vmatpush1.msra.mxu0 %v485
    %531 = vmatprep.subr.mxu0 %v488
    %532 = vmatpush1.msra.mxu0 %v487
    %533 = vmatprep.subr.mxu0 %v490
    %534 = vmatpush1.msra.mxu0 %v489
    %535 = vmatprep.subr.mxu0 %v492
    %536 = vmatpush1.msra.mxu0 %v491
    %537 = vmatprep.subr.mxu0 %v494
    %538 = vmatpush1.msra.mxu0 %v493
    %539 = vmatprep.subr.mxu0 %v496
    %540 = vmatpush1.msra.mxu0 %v495
    %541 = vmatprep.subr.mxu0 %v498
    %542 = vmatpush1.msra.mxu0 %v497
    %543 = vmatprep.subr.mxu0 %v500
    %544 = vmatpush1.msra.mxu0 %v499
    %545 = vmatprep.subr.mxu0 %v502
    %546 = vmatpush1.msra.mxu0 %v501
    %547 = vmatprep.subr.mxu0 %v504
    %548 = vmatpush1.msra.mxu0 %v503
    %549 = vmatprep.subr.mxu0 %v506
    %550 = vmatpush1.msra.mxu0 %v505
    %551 = vmatprep.subr.mxu0 0.0
    %552 = vmatpush1.msra.mxu0 0.0
    %553 = vmatprep.subr.mxu0 0.0
    %554 = vmatpush1.msra.mxu0 0.0
    %555 = vmatprep.subr.mxu0 0.0
    %556 = vmatpush1.msra.mxu0 0.0
    %557 = vmatprep.subr.mxu0 0.0
    %558 = vmatpush1.msra.mxu0 0.0
    %559 = vmatprep.subr.mxu0 0.0
    %560 = vmatpush1.msra.mxu0 0.0
    %561 = vmatprep.subr.mxu0 0.0
    %562 = vmatpush1.msra.mxu0 0.0
    %563 = vmatprep.subr.mxu0 0.0
    %564 = vmatpush1.msra.mxu0 0.0
    %565 = vmatprep.subr.mxu0 0.0
    %566 = vmatpush1.msra.mxu0 0.0
    %567 = vmatprep.subr.mxu0 0.0
    %568 = vmatpush1.msra.mxu0 0.0
    %569 = vmatprep.subr.mxu0 0.0
    %570 = vmatpush1.msra.mxu0 0.0
    %571 = vmatprep.subr.mxu0 0.0
    %572 = vmatpush1.msra.mxu0 0.0
    %573 = vmatprep.subr.mxu0 0.0
    %574 = vmatpush1.msra.mxu0 0.0
    %575 = vmatprep.subr.mxu0 0.0
    %576 = vmatpush1.msra.mxu0 0.0
    %577 = vmatprep.subr.mxu0 0.0
    %578 = vmatpush1.msra.mxu0 0.0
    %579 = vmatprep.subr.mxu0 0.0
    %580 = vmatpush1.msra.mxu0 0.0
    %581 = vmatprep.subr.mxu0 0.0
    %582 = vmatpush1.msra.mxu0 0.0
    %583 = vmatprep.mubr.f32.mxu0 0.0
    %584 = vmatmul.mubr.f32.gmra.mrb[0].mxu0 %v474
    %v585 = vpop.f32.mrb[0].mxu0
    %v586 = vadd.f32 %v512, %v585
    %v587 = vpop.f32.mrb[0].mxu0
    %v588 = vadd.f32 %v516, %v587
    %589 = vdwg.mxu0
    %v590 = vmax.f32 %v586, 0.0
    %v591 = vmax.f32 %v588, 0.0
    %v592 = vld [vmem:[#allocation10] sm:$0xff]
    %v593 = vld [vmem:[#allocation10 + $0x8] sm:$0xff]
    %v594 = vld [vmem:[#allocation10 + $0x10] sm:$0xff]
    %v595 = vld [vmem:[#allocation10 + $0x18] sm:$0xff]
    %v596 = vld [vmem:[#allocation10 + $0x20] sm:$0xff]
    %v597 = vld [vmem:[#allocation10 + $0x28] sm:$0xff]
    %v598 = vld [vmem:[#allocation10 + $0x30] sm:$0xff]
    %v599 = vld [vmem:[#allocation10 + $0x38] sm:$0xff]
    %v600 = vld [vmem:[#allocation10 + $0x40] sm:$0xff]
    %v601 = vld [vmem:[#allocation10 + $0x48] sm:$0xff]
    %v602 = vld [vmem:[#allocation10 + $0x50] sm:$0xff]
    %v603 = vld [vmem:[#allocation10 + $0x58] sm:$0xff]
    %v604 = vld [vmem:[#allocation10 + $0x60] sm:$0xff]
    %v605 = vld [vmem:[#allocation10 + $0x68] sm:$0xff]
    %v606 = vld [vmem:[#allocation10 + $0x70] sm:$0xff]
    %v607 = vld [vmem:[#allocation10 + $0x78] sm:$0xff]
    %v608 = vld [vmem:[#allocation10 + $0x80] sm:$0xff]
    %v609 = vld [vmem:[#allocation10 + $0x88] sm:$0xff]
    %v610 = vld [vmem:[#allocation10 + $0x90] sm:$0xff]
    %v611 = vld [vmem:[#allocation10 + $0x98] sm:$0xff]
    %v612 = vld [vmem:[#allocation10 + $0xa0] sm:$0xff]
    %v613 = vld [vmem:[#allocation10 + $0xa8] sm:$0xff]
    %v614 = vld [vmem:[#allocation10 + $0xb0] sm:$0xff]
    %v615 = vld [vmem:[#allocation10 + $0xb8] sm:$0xff]
    %v616 = vld [vmem:[#allocation10 + $0xc0] sm:$0xff]
    %v617 = vld [vmem:[#allocation10 + $0xc8] sm:$0xff]
    %v618 = vld [vmem:[#allocation10 + $0xd0] sm:$0xff]
    %v619 = vld [vmem:[#allocation10 + $0xd8] sm:$0xff]
    %v620 = vld [vmem:[#allocation10 + $0xe0] sm:$0xff]
    %v621 = vld [vmem:[#allocation10 + $0xe8] sm:$0xff]
    %v622 = vld [vmem:[#allocation10 + $0xf0] sm:$0xff]
    %v623 = vld [vmem:[#allocation10 + $0xf8] sm:$0xff]
    %v624 = vld [vmem:[%s10] sm:$0x1]
    %v626 = vlaneseq
    %v627 = vshrl.u32 %v626, 7
    %v628 = vsub.s32 0, %v627
    %v629 = vrot.slane %v624, %v628
    %631 = vmatprep.subr.mxu0 0.0
    %632 = vmatpush1.msra.mxu0 %v592
    %633 = vmatprep.subr.mxu0 0.0
    %634 = vmatpush1.msra.mxu0 %v593
    %635 = vmatprep.subr.mxu0 0.0
    %636 = vmatpush1.msra.mxu0 %v594
    %637 = vmatprep.subr.mxu0 0.0
    %638 = vmatpush1.msra.mxu0 %v595
    %639 = vmatprep.subr.mxu0 0.0
    %640 = vmatpush1.msra.mxu0 %v596
    %641 = vmatprep.subr.mxu0 0.0
    %642 = vmatpush1.msra.mxu0 %v597
    %643 = vmatprep.subr.mxu0 0.0
    %644 = vmatpush1.msra.mxu0 %v598
    %645 = vmatprep.subr.mxu0 0.0
    %646 = vmatpush1.msra.mxu0 %v599
    %647 = vmatprep.subr.mxu0 0.0
    %648 = vmatpush1.msra.mxu0 %v600
    %649 = vmatprep.subr.mxu0 0.0
    %650 = vmatpush1.msra.mxu0 %v601
    %651 = vmatprep.subr.mxu0 0.0
    %652 = vmatpush1.msra.mxu0 %v602
    %653 = vmatprep.subr.mxu0 0.0
    %654 = vmatpush1.msra.mxu0 %v603
    %655 = vmatprep.subr.mxu0 0.0
    %656 = vmatpush1.msra.mxu0 %v604
    %657 = vmatprep.subr.mxu0 0.0
    %658 = vmatpush1.msra.mxu0 %v605
    %659 = vmatprep.subr.mxu0 0.0
    %660 = vmatpush1.msra.mxu0 %v606
    %661 = vmatprep.subr.mxu0 0.0
    %662 = vmatpush1.msra.mxu0 %v607
    %663 = vmatprep.subr.mxu0 0.0
    %664 = vmatpush1.msra.mxu0 %v608
    %665 = vmatprep.subr.mxu0 0.0
    %666 = vmatpush1.msra.mxu0 %v609
    %667 = vmatprep.subr.mxu0 0.0
    %668 = vmatpush1.msra.mxu0 %v610
    %669 = vmatprep.subr.mxu0 0.0
    %670 = vmatpush1.msra.mxu0 %v611
    %671 = vmatprep.subr.mxu0 0.0
    %672 = vmatpush1.msra.mxu0 %v612
    %673 = vmatprep.subr.mxu0 0.0
    %674 = vmatpush1.msra.mxu0 %v613
    %675 = vmatprep.subr.mxu0 0.0
    %676 = vmatpush1.msra.mxu0 %v614
    %677 = vmatprep.subr.mxu0 0.0
    %678 = vmatpush1.msra.mxu0 %v615
    %679 = vmatprep.subr.mxu0 0.0
    %680 = vmatpush1.msra.mxu0 %v616
    %681 = vmatprep.subr.mxu0 0.0
    %682 = vmatpush1.msra.mxu0 %v617
    %683 = vmatprep.subr.mxu0 0.0
    %684 = vmatpush1.msra.mxu0 %v618
    %685 = vmatprep.subr.mxu0 0.0
    %686 = vmatpush1.msra.mxu0 %v619
    %687 = vmatprep.subr.mxu0 0.0
    %688 = vmatpush1.msra.mxu0 %v620
    %689 = vmatprep.subr.mxu0 0.0
    %690 = vmatpush1.msra.mxu0 %v621
    %691 = vmatprep.subr.mxu0 0.0
    %692 = vmatpush1.msra.mxu0 %v622
    %693 = vmatprep.subr.mxu0 0.0
    %694 = vmatpush1.msra.mxu0 %v623
    %695 = vmatprep.mubr.f32.mxu0 %v591
    %696 = vmatmul.mubr.f32.gmra.mrb[0].mxu0 %v590
    %v697 = vpop.f32.mrb[0].mxu0
    %v698 = vadd.f32 %v629, %v697
    %v699 = vpop.f32.mrb[0].mxu0
    %700 = vdwg.mxu0
    %v701 = vadd.f32 %v474, %v698
    %v702 = vld [vmem:[%s11] sm:$0x1]
    %v703 = vld [vmem:[%s12] sm:$0x1]
    %704 = vmatprep.subr.mxu0 0.0
    %705 = vmatpush1.msra.mxu0 0.0078125
    %706 = vmatprep.subr.mxu0 0.0
    %707 = vmatpush1.msra.mxu0 0.0078125
    %708 = vmatprep.subr.mxu0 0.0
    %709 = vmatpush1.msra.mxu0 0.0078125
    %710 = vmatprep.subr.mxu0 0.0
    %711 = vmatpush1.msra.mxu0 0.0078125
    %712 = vmatprep.subr.mxu0 0.0
    %713 = vmatpush1.msra.mxu0 0.0078125
    %714 = vmatprep.subr.mxu0 0.0
    %715 = vmatpush1.msra.mxu0 0.0078125
    %716 = vmatprep.subr.mxu0 0.0
    %717 = vmatpush1.msra.mxu0 0.0078125
    %718 = vmatprep.subr.mxu0 0.0
    %719 = vmatpush1.msra.mxu0 0.0078125
    %720 = vmatprep.subr.mxu0 0.0
    %721 = vmatpush1.msra.mxu0 0.0078125
    %722 = vmatprep.subr.mxu0 0.0
    %723 = vmatpush1.msra.mxu0 0.0078125
    %724 = vmatprep.subr.mxu0 0.0
    %725 = vmatpush1.msra.mxu0 0.0078125
    %726 = vmatprep.subr.mxu0 0.0
    %727 = vmatpush1.msra.mxu0 0.0078125
    %728 = vmatprep.subr.mxu0 0.0
    %729 = vmatpush1.msra.mxu0 0.0078125
    %730 = vmatprep.subr.mxu0 0.0
    %731 = vmatpush1.msra.mxu0 0.0078125
    %732 = vmatprep.subr.mxu0 0.0
    %733 = vmatpush1.msra.mxu0 0.0078125
    %734 = vmatprep.subr.mxu0 0.0
    %735 = vmatpush1.msra.mxu0 0.0078125
    %736 = vmatprep.subr.mxu0 0.0
    %737 = vmatpush1.msra.mxu0 0.0
    %738 = vmatprep.subr.mxu0 0.0
    %739 = vmatpush1.msra.mxu0 0.0
    %740 = vmatprep.subr.mxu0 0.0
    %741 = vmatpush1.msra.mxu0 0.0
    %742 = vmatprep.subr.mxu0 0.0
    %743 = vmatpush1.msra.mxu0 0.0
    %744 = vmatprep.subr.mxu0 0.0
    %745 = vmatpush1.msra.mxu0 0.0
    %746 = vmatprep.subr.mxu0 0.0
    %747 = vmatpush1.msra.mxu0 0.0
    %748 = vmatprep.subr.mxu0 0.0
    %749 = vmatpush1.msra.mxu0 0.0
    %750 = vmatprep.subr.mxu0 0.0
    %751 = vmatpush1.msra.mxu0 0.0
    %752 = vmatprep.subr.mxu0 0.0
    %753 = vmatpush1.msra.mxu0 0.0
    %754 = vmatprep.subr.mxu0 0.0
    %755 = vmatpush1.msra.mxu0 0.0
    %756 = vmatprep.subr.mxu0 0.0
    %757 = vmatpush1.msra.mxu0 0.0
    %758 = vmatprep.subr.mxu0 0.0
    %759 = vmatpush1.msra.mxu0 0.0
    %760 = vmatprep.subr.mxu0 0.0
    %761 = vmatpush1.msra.mxu0 0.0
    %762 = vmatprep.subr.mxu0 0.0
    %763 = vmatpush1.msra.mxu0 0.0
    %764 = vmatprep.subr.mxu0 0.0
    %765 = vmatpush1.msra.mxu0 0.0
    %766 = vmatprep.subr.mxu0 0.0
    %767 = vmatpush1.msra.mxu0 0.0
    %768 = vmatprep.mubr.f32.mxu0 0.0
    %769 = vmatmul.mubr.f32.gmra.mrb[0].mxu0 %v701
    %v770 = vpop.f32.mrb[0].mxu0
    %v771 = vadd.f32 0.0, %v770
    %v772 = vpop.f32.mrb[0].mxu0
    %773 = vdwg.mxu0
    %v774 = vsub.f32 %v701, %v771
    %v775 = vmul.f32 %v774, %v774
    %776 = vmatprep.subr.mxu0 0.0
    %777 = vmatpush1.msra.mxu0 0.0078125
    %778 = vmatprep.subr.mxu0 0.0
    %779 = vmatpush1.msra.mxu0 0.0078125
    %780 = vmatprep.subr.mxu0 0.0
    %781 = vmatpush1.msra.mxu0 0.0078125
    %782 = vmatprep.subr.mxu0 0.0
    %783 = vmatpush1.msra.mxu0 0.0078125
    %784 = vmatprep.subr.mxu0 0.0
    %785 = vmatpush1.msra.mxu0 0.0078125
    %786 = vmatprep.subr.mxu0 0.0
    %787 = vmatpush1.msra.mxu0 0.0078125
    %788 = vmatprep.subr.mxu0 0.0
    %789 = vmatpush1.msra.mxu0 0.0078125
    %790 = vmatprep.subr.mxu0 0.0
    %791 = vmatpush1.msra.mxu0 0.0078125
    %792 = vmatprep.subr.mxu0 0.0
    %793 = vmatpush1.msra.mxu0 0.0078125
    %794 = vmatprep.subr.mxu0 0.0
    %795 = vmatpush1.msra.mxu0 0.0078125
    %796 = vmatprep.subr.mxu0 0.0
    %797 = vmatpush1.msra.mxu0 0.0078125
    %798 = vmatprep.subr.mxu0 0.0
    %799 = vmatpush1.msra.mxu0 0.0078125
    %800 = vmatprep.subr.mxu0 0.0
    %801 = vmatpush1.msra.mxu0 0.0078125
    %802 = vmatprep.subr.mxu0 0.0
    %803 = vmatpush1.msra.mxu0 0.0078125
    %804 = vmatprep.subr.mxu0 0.0
    %805 = vmatpush1.msra.mxu0 0.0078125
    %806 = vmatprep.subr.mxu0 0.0
    %807 = vmatpush1.msra.mxu0 0.0078125
    %808 = vmatprep.subr.mxu0 0.0
    %809 = vmatpush1.msra.mxu0 0.0
    %810 = vmatprep.subr.mxu0 0.0
    %811 = vmatpush1.msra.mxu0 0.0
    %812 = vmatprep.subr.mxu0 0.0
    %813 = vmatpush1.msra.mxu0 0.0
    %814 = vmatprep.subr.mxu0 0.0
    %815 = vmatpush1.msra.mxu0 0.0
    %816 = vmatprep.subr.mxu0 0.0
    %817 = vmatpush1.msra.mxu0 0.0
    %818 = vmatprep.subr.mxu0 0.0
    %819 = vmatpush1.msra.mxu0 0.0
    %820 = vmatprep.subr.mxu0 0.0
    %821 = vmatpush1.msra.mxu0 0.0
    %822 = vmatprep.subr.mxu0 0.0
    %823 = vmatpush1.msra.mxu0 0.0
    %824 = vmatprep.subr.mxu0 0.0
    %825 = vmatpush1.msra.mxu0 0.0
    %826 = vmatprep.subr.mxu0 0.0
    %827 = vmatpush1.msra.mxu0 0.0
    %828 = vmatprep.subr.mxu0 0.0
    %829 = vmatpush1.msra.mxu0 0.0
    %830 = vmatprep.subr.mxu0 0.0
    %831 = vmatpush1.msra.mxu0 0.0
    %832 = vmatprep.subr.mxu0 0.0
    %833 = vmatpush1.msra.mxu0 0.0
    %834 = vmatprep.subr.mxu0 0.0
    %835 = vmatpush1.msra.mxu0 0.0
    %836 = vmatprep.subr.mxu0 0.0
    %837 = vmatpush1.msra.mxu0 0.0
    %838 = vmatprep.subr.mxu0 0.0
    %839 = vmatpush1.msra.mxu0 0.0
    %840 = vmatprep.mubr.f32.mxu0 0.0
    %841 = vmatmul.mubr.f32.gmra.mrb[0].mxu0 %v775
    %v842 = vpop.f32.mrb[0].mxu0
    %v843 = vadd.f32 1e-05, %v842
    %v844 = vpop.f32.mrb[0].mxu0
    %845 = vdwg.mxu0
    %v846 = vrsqrt.pop %v843
    %v847 = vmul.f32 %v774, %v846
    %v849 = vlaneseq
    %v850 = vshrl.u32 %v849, 7
    %v851 = vsub.s32 0, %v850
    %v852 = vrot.slane %v702, %v851
    %v854 = vmul.f32 %v847, %v852
    %v856 = vlaneseq
    %v857 = vshrl.u32 %v856, 7
    %v858 = vsub.s32 0, %v857
    %v859 = vrot.slane %v703, %v858
    %v861 = vadd.f32 %v854, %v859
    %s862 = scalar_lea.vmem [#allocation7], 128
    %v863 = vld [vmem:[%s862] sm:$0xff]
    %v864 = vld [vmem:[%s862 + $0x8] sm:$0xff]
    %v865 = vld [vmem:[%s862 + $0x10] sm:$0xff]
    %v866 = vld [vmem:[%s862 + $0x18] sm:$0xff]
    %v867 = vld [vmem:[%s862 + $0x20] sm:$0xff]
    %v868 = vld [vmem:[%s862 + $0x28] sm:$0xff]
    %v869 = vld [vmem:[%s862 + $0x30] sm:$0xff]
    %v870 = vld [vmem:[%s862 + $0x38] sm:$0xff]
    %v871 = vld [vmem:[%s862 + $0x40] sm:$0xff]
    %v872 = vld [vmem:[%s862 + $0x48] sm:$0xff]
    %v873 = vld [vmem:[%s862 + $0x50] sm:$0xff]
    %v874 = vld [vmem:[%s862 + $0x58] sm:$0xff]
    %v875 = vld [vmem:[%s862 + $0x60] sm:$0xff]
    %v876 = vld [vmem:[%s862 + $0x68] sm:$0xff]
    %v877 = vld [vmem:[%s862 + $0x70] sm:$0xff]
    %v878 = vld [vmem:[%s862 + $0x78] sm:$0xff]
    %s879 = scalar_lea.vmem %s4, 1
    %v880 = vld [vmem:[%s879] sm:$0x1]
    %v882 = vlaneseq
    %v883 = vshrl.u32 %v882, 7
    %v884 = vsub.s32 0, %v883
    %v885 = vrot.slane %v880, %v884
    %887 = vmatprep.subr.mxu0 0.0
    %888 = vmatpush1.msra.mxu0 %v863
    %889 = vmatprep.subr.mxu0 0.0
    %890 = vmatpush1.msra.mxu0 %v864
    %891 = vmatprep.subr.mxu0 0.0
    %892 = vmatpush1.msra.mxu0 %v865
    %893 = vmatprep.subr.mxu0 0.0
    %894 = vmatpush1.msra.mxu0 %v866
    %895 = vmatprep.subr.mxu0 0.0
    %896 = vmatpush1.msra.mxu0 %v867
    %897 = vmatprep.subr.mxu0 0.0
    %898 = vmatpush1.msra.mxu0 %v868
    %899 = vmatprep.subr.mxu0 0.0
    %900 = vmatpush1.msra.mxu0 %v869
    %901 = vmatprep.subr.mxu0 0.0
    %902 = vmatpush1.msra.mxu0 %v870
    %903 = vmatprep.subr.mxu0 0.0
    %904 = vmatpush1.msra.mxu0 %v871
    %905 = vmatprep.subr.mxu0 0.0
    %906 = vmatpush1.msra.mxu0 %v872
    %907 = vmatprep.subr.mxu0 0.0
    %908 = vmatpush1.msra.mxu0 %v873
    %909 = vmatprep.subr.mxu0 0.0
    %910 = vmatpush1.msra.mxu0 %v874
    %911 = vmatprep.subr.mxu0 0.0
    %912 = vmatpush1.msra.mxu0 %v875
    %913 = vmatprep.subr.mxu0 0.0
    %914 = vmatpush1.msra.mxu0 %v876
    %915 = vmatprep.subr.mxu0 0.0
    %916 = vmatpush1.msra.mxu0 %v877
    %917 = vmatprep.subr.mxu0 0.0
    %918 = vmatpush1.msra.mxu0 %v878
    %919 = vmatprep.subr.mxu0 0.0
    %920 = vmatpush1.msra.mxu0 0.0
    %921 = vmatprep.subr.mxu0 0.0
    %922 = vmatpush1.msra.mxu0 0.0
    %923 = vmatprep.subr.mxu0 0.0
    %924 = vmatpush1.msra.mxu0 0.0
    %925 = vmatprep.subr.mxu0 0.0
    %926 = vmatpush1.msra.mxu0 0.0
    %927 = vmatprep.subr.mxu0 0.0
    %928 = vmatpush1.msra.mxu0 0.0
    %929 = vmatprep.subr.mxu0 0.0
    %930 = vmatpush1.msra.mxu0 0.0
    %931 = vmatprep.subr.mxu0 0.0
    %932 = vmatpush1.msra.mxu0 0.0
    %933 = vmatprep.subr.mxu0 0.0
    %934 = vmatpush1.msra.mxu0 0.0
    %935 = vmatprep.subr.mxu0 0.0
    %936 = vmatpush1.msra.mxu0 0.0
    %937 = vmatprep.subr.mxu0 0.0
    %938 = vmatpush1.msra.mxu0 0.0
    %939 = vmatprep.subr.mxu0 0.0
    %940 = vmatpush1.msra.mxu0 0.0
    %941 = vmatprep.subr.mxu0 0.0
    %942 = vmatpush1.msra.mxu0 0.0
    %943 = vmatprep.subr.mxu0 0.0
    %944 = vmatpush1.msra.mxu0 0.0
    %945 = vmatprep.subr.mxu0 0.0
    %946 = vmatpush1.msra.mxu0 0.0
    %947 = vmatprep.subr.mxu0 0.0
    %948 = vmatpush1.msra.mxu0 0.0
    %949 = vmatprep.subr.mxu0 0.0
    %950 = vmatpush1.msra.mxu0 0.0
    %951 = vmatprep.mubr.f32.mxu0 0.0
    %952 = vmatmul.mubr.f32.gmra.mrb[0].mxu0 %v861
    %v953 = vpop.f32.mrb[0].mxu0
    %v954 = vadd.f32 %v885, %v953
    %v955 = vpop.f32.mrb[0].mxu0
    %956 = vdwg.mxu0
    %v957 = vadd.f32 %v861, %v954
    %s958 = scalar_lea.vmem %s5, 1
    %v959 = vld [vmem:[%s958] sm:$0x1]
    %s960 = scalar_lea.vmem %s6, 1
    %v961 = vld [vmem:[%s960] sm:$0x1]
    %962 = vmatprep.subr.mxu0 0.0
    %963 = vmatpush1.msra.mxu0 0.0078125
    %964 = vmatprep.subr.mxu0 0.0
    %965 = vmatpush1.msra.mxu0 0.0078125
    %966 = vmatprep.subr.mxu0 0.0
    %967 = vmatpush1.msra.mxu0 0.0078125
    %968 = vmatprep.subr.mxu0 0.0
    %969 = vmatpush1.msra.mxu0 0.0078125
    %970 = vmatprep.subr.mxu0 0.0
    %971 = vmatpush1.msra.mxu0 0.0078125
    %972 = vmatprep.subr.mxu0 0.0
    %973 = vmatpush1.msra.mxu0 0.0078125
    %974 = vmatprep.subr.mxu0 0.0
    %975 = vmatpush1.msra.mxu0 0.0078125
    %976 = vmatprep.subr.mxu0 0.0
    %977 = vmatpush1.msra.mxu0 0.0078125
    %978 = vmatprep.subr.mxu0 0.0
    %979 = vmatpush1.msra.mxu0 0.0078125
    %980 = vmatprep.subr.mxu0 0.0
    %981 = vmatpush1.msra.mxu0 0.0078125
    %982 = vmatprep.subr.mxu0 0.0
    %983 = vmatpush1.msra.mxu0 0.0078125
    %984 = vmatprep.subr.mxu0 0.0
    %985 = vmatpush1.msra.mxu0 0.0078125
    %986 = vmatprep.subr.mxu0 0.0
    %987 = vmatpush1.msra.mxu0 0.0078125
    %988 = vmatprep.subr.mxu0 0.0
    %989 = vmatpush1.msra.mxu0 0.0078125
    %990 = vmatprep.subr.mxu0 0.0
    %991 = vmatpush1.msra.mxu0 0.0078125
    %992 = vmatprep.subr.mxu0 0.0
    %993 = vmatpush1.msra.mxu0 0.0078125
    %994 = vmatprep.subr.mxu0 0.0
    %995 = vmatpush1.msra.mxu0 0.0
    %996 = vmatprep.subr.mxu0 0.0
    %997 = vmatpush1.msra.mxu0 0.0
    %998 = vmatprep.subr.mxu0 0.0
    %999 = vmatpush1.msra.mxu0 0.0
    %1000 = vmatprep.subr.mxu0 0.0
    %1001 = vmatpush1.msra.mxu0 0.0
    %1002 = vmatprep.subr.mxu0 0.0
    %1003 = vmatpush1.msra.mxu0 0.0
    %1004 = vmatprep.subr.mxu0 0.0
    %1005 = vmatpush1.msra.mxu0 0.0
    %1006 = vmatprep.subr.mxu0 0.0
    %1007 = vmatpush1.msra.mxu0 0.0
    %1008 = vmatprep.subr.mxu0 0.0
    %1009 = vmatpush1.msra.mxu0 0.0
    %1010 = vmatprep.subr.mxu0 0.0
    %1011 = vmatpush1.msra.mxu0 0.0
    %1012 = vmatprep.subr.mxu0 0.0
    %1013 = vmatpush1.msra.mxu0 0.0
    %1014 = vmatprep.subr.mxu0 0.0
    %1015 = vmatpush1.msra.mxu0 0.0
    %1016 = vmatprep.subr.mxu0 0.0
    %1017 = vmatpush1.msra.mxu0 0.0
    %1018 = vmatprep.subr.mxu0 0.0
    %1019 = vmatpush1.msra.mxu0 0.0
    %1020 = vmatprep.subr.mxu0 0.0
    %1021 = vmatpush1.msra.mxu0 0.0
    %1022 = vmatprep.subr.mxu0 0.0
    %1023 = vmatpush1.msra.mxu0 0.0
    %1024 = vmatprep.subr.mxu0 0.0
    %1025 = vmatpush1.msra.mxu0 0.0
    %1026 = vmatprep.mubr.f32.mxu0 0.0
    %1027 = vmatmul.mubr.f32.gmra.mrb[0].mxu0 %v957
    %v1028 = vpop.f32.mrb[0].mxu0
    %v1029 = vadd.f32 0.0, %v1028
    %v1030 = vpop.f32.mrb[0].mxu0
    %1031 = vdwg.mxu0
    %v1032 = vsub.f32 %v957, %v1029
    %v1033 = vmul.f32 %v1032, %v1032
    %1034 = vmatprep.subr.mxu0 0.0
    %1035 = vmatpush1.msra.mxu0 0.0078125
    %1036 = vmatprep.subr.mxu0 0.0
    %1037 = vmatpush1.msra.mxu0 0.0078125
    %1038 = vmatprep.subr.mxu0 0.0
    %1039 = vmatpush1.msra.mxu0 0.0078125
    %1040 = vmatprep.subr.mxu0 0.0
    %1041 = vmatpush1.msra.mxu0 0.0078125
    %1042 = vmatprep.subr.mxu0 0.0
    %1043 = vmatpush1.msra.mxu0 0.0078125
    %1044 = vmatprep.subr.mxu0 0.0
    %1045 = vmatpush1.msra.mxu0 0.0078125
    %1046 = vmatprep.subr.mxu0 0.0
    %1047 = vmatpush1.msra.mxu0 0.0078125
    %1048 = vmatprep.subr.mxu0 0.0
    %1049 = vmatpush1.msra.mxu0 0.0078125
    %1050 = vmatprep.subr.mxu0 0.0
    %1051 = vmatpush1.msra.mxu0 0.0078125
    %1052 = vmatprep.subr.mxu0 0.0
    %1053 = vmatpush1.msra.mxu0 0.0078125
    %1054 = vmatprep.subr.mxu0 0.0
    %1055 = vmatpush1.msra.mxu0 0.0078125
    %1056 = vmatprep.subr.mxu0 0.0
    %1057 = vmatpush1.msra.mxu0 0.0078125
    %1058 = vmatprep.subr.mxu0 0.0
    %1059 = vmatpush1.msra.mxu0 0.0078125
    %1060 = vmatprep.subr.mxu0 0.0
    %1061 = vmatpush1.msra.mxu0 0.0078125
    %1062 = vmatprep.subr.mxu0 0.0
    %1063 = vmatpush1.msra.mxu0 0.0078125
    %1064 = vmatprep.subr.mxu0 0.0
    %1065 = vmatpush1.msra.mxu0 0.0078125
    %1066 = vmatprep.subr.mxu0 0.0
    %1067 = vmatpush1.msra.mxu0 0.0
    %1068 = vmatprep.subr.mxu0 0.0
    %1069 = vmatpush1.msra.mxu0 0.0
    %1070 = vmatprep.subr.mxu0 0.0
    %1071 = vmatpush1.msra.mxu0 0.0
    %1072 = vmatprep.subr.mxu0 0.0
    %1073 = vmatpush1.msra.mxu0 0.0
    %1074 = vmatprep.subr.mxu0 0.0
    %1075 = vmatpush1.msra.mxu0 0.0
    %1076 = vmatprep.subr.mxu0 0.0
    %1077 = vmatpush1.msra.mxu0 0.0
    %1078 = vmatprep.subr.mxu0 0.0
    %1079 = vmatpush1.msra.mxu0 0.0
    %1080 = vmatprep.subr.mxu0 0.0
    %1081 = vmatpush1.msra.mxu0 0.0
    %1082 = vmatprep.subr.mxu0 0.0
    %1083 = vmatpush1.msra.mxu0 0.0
    %1084 = vmatprep.subr.mxu0 0.0
    %1085 = vmatpush1.msra.mxu0 0.0
    %1086 = vmatprep.subr.mxu0 0.0
    %1087 = vmatpush1.msra.mxu0 0.0
    %1088 = vmatprep.subr.mxu0 0.0
    %1089 = vmatpush1.msra.mxu0 0.0
    %1090 = vmatprep.subr.mxu0 0.0
    %1091 = vmatpush1.msra.mxu0 0.0
    %1092 = vmatprep.subr.mxu0 0.0
    %1093 = vmatpush1.msra.mxu0 0.0
    %1094 = vmatprep.subr.mxu0 0.0
    %1095 = vmatpush1.msra.mxu0 0.0
    %1096 = vmatprep.subr.mxu0 0.0
    %1097 = vmatpush1.msra.mxu0 0.0
    %1098 = vmatprep.mubr.f32.mxu0 0.0
    %1099 = vmatmul.mubr.f32.gmra.mrb[0].mxu0 %v1033
    %v1100 = vpop.f32.mrb[0].mxu0
    %v1101 = vadd.f32 1e-05, %v1100
    %v1102 = vpop.f32.mrb[0].mxu0
    %1103 = vdwg.mxu0
    %v1104 = vrsqrt.pop %v1101
    %v1105 = vmul.f32 %v1032, %v1104
    %v1107 = vlaneseq
    %v1108 = vshrl.u32 %v1107, 7
    %v1109 = vsub.s32 0, %v1108
    %v1110 = vrot.slane %v959, %v1109
    %v1112 = vmul.f32 %v1105, %v1110
    %v1114 = vlaneseq
    %v1115 = vshrl.u32 %v1114, 7
    %v1116 = vsub.s32 0, %v1115
    %v1117 = vrot.slane %v961, %v1116
    %v1119 = vadd.f32 %v1112, %v1117
    %s1120 = scalar_lea.vmem [#allocation8], 256
    %v1121 = vld [vmem:[%s1120] sm:$0xff]
    %v1122 = vld [vmem:[%s1120 + $0x8] sm:$0xff]
    %v1123 = vld [vmem:[%s1120 + $0x10] sm:$0xff]
    %v1124 = vld [vmem:[%s1120 + $0x18] sm:$0xff]
    %v1125 = vld [vmem:[%s1120 + $0x20] sm:$0xff]
    %v1126 = vld [vmem:[%s1120 + $0x28] sm:$0xff]
    %v1127 = vld [vmem:[%s1120 + $0x30] sm:$0xff]
    %v1128 = vld [vmem:[%s1120 + $0x38] sm:$0xff]
    %v1129 = vld [vmem:[%s1120 + $0x40] sm:$0xff]
    %v1130 = vld [vmem:[%s1120 + $0x48] sm:$0xff]
    %v1131 = vld [vmem:[%s1120 + $0x50] sm:$0xff]
    %v1132 = vld [vmem:[%s1120 + $0x58] sm:$0xff]
    %v1133 = vld [vmem:[%s1120 + $0x60] sm:$0xff]
    %v1134 = vld [vmem:[%s1120 + $0x68] sm:$0xff]
    %v1135 = vld [vmem:[%s1120 + $0x70] sm:$0xff]
    %v1136 = vld [vmem:[%s1120 + $0x78] sm:$0xff]
    %v1137 = vld [vmem:[%s1120 + $0x80] sm:$0xff]
    %v1138 = vld [vmem:[%s1120 + $0x88] sm:$0xff]
    %v1139 = vld [vmem:[%s1120 + $0x90] sm:$0xff]
    %v1140 = vld [vmem:[%s1120 + $0x98] sm:$0xff]
    %v1141 = vld [vmem:[%s1120 + $0xa0] sm:$0xff]
    %v1142 = vld [vmem:[%s1120 + $0xa8] sm:$0xff]
    %v1143 = vld [vmem:[%s1120 + $0xb0] sm:$0xff]
    %v1144 = vld [vmem:[%s1120 + $0xb8] sm:$0xff]
    %v1145 = vld [vmem:[%s1120 + $0xc0] sm:$0xff]
    %v1146 = vld [vmem:[%s1120 + $0xc8] sm:$0xff]
    %v1147 = vld [vmem:[%s1120 + $0xd0] sm:$0xff]
    %v1148 = vld [vmem:[%s1120 + $0xd8] sm:$0xff]
    %v1149 = vld [vmem:[%s1120 + $0xe0] sm:$0xff]
    %v1150 = vld [vmem:[%s1120 + $0xe8] sm:$0xff]
    %v1151 = vld [vmem:[%s1120 + $0xf0] sm:$0xff]
    %v1152 = vld [vmem:[%s1120 + $0xf8] sm:$0xff]
    %s1153 = scalar_lea.vmem %s8, 2
    %v1154 = vld [vmem:[%s1153] sm:$0x3]
    %v1156 = vlaneseq
    %v1157 = vshrl.u32 %v1156, 7
    %v1158 = vsub.s32 0, %v1157
    %v1159 = vrot.slane %v1154, %v1158
    %v1160 = vlaneseq
    %v1161 = vshrl.u32 %v1160, 7
    %v1162 = vsub.s32 1, %v1161
    %v1163 = vrot.slane %v1154, %v1162
    %1166 = vmatprep.subr.mxu0 %v1122
    %1167 = vmatpush1.msra.mxu0 %v1121
    %1168 = vmatprep.subr.mxu0 %v1124
    %1169 = vmatpush1.msra.mxu0 %v1123
    %1170 = vmatprep.subr.mxu0 %v1126
    %1171 = vmatpush1.msra.mxu0 %v1125
    %1172 = vmatprep.subr.mxu0 %v1128
    %1173 = vmatpush1.msra.mxu0 %v1127
    %1174 = vmatprep.subr.mxu0 %v1130
    %1175 = vmatpush1.msra.mxu0 %v1129
    %1176 = vmatprep.subr.mxu0 %v1132
    %1177 = vmatpush1.msra.mxu0 %v1131
    %1178 = vmatprep.subr.mxu0 %v1134
    %1179 = vmatpush1.msra.mxu0 %v1133
    %1180 = vmatprep.subr.mxu0 %v1136
    %1181 = vmatpush1.msra.mxu0 %v1135
    %1182 = vmatprep.subr.mxu0 %v1138
    %1183 = vmatpush1.msra.mxu0 %v1137
    %1184 = vmatprep.subr.mxu0 %v1140
    %1185 = vmatpush1.msra.mxu0 %v1139
    %1186 = vmatprep.subr.mxu0 %v1142
    %1187 = vmatpush1.msra.mxu0 %v1141
    %1188 = vmatprep.subr.mxu0 %v1144
    %1189 = vmatpush1.msra.mxu0 %v1143
    %1190 = vmatprep.subr.mxu0 %v1146
    %1191 = vmatpush1.msra.mxu0 %v1145
    %1192 = vmatprep.subr.mxu0 %v1148
    %1193 = vmatpush1.msra.mxu0 %v1147
    %1194 = vmatprep.subr.mxu0 %v1150
    %1195 = vmatpush1.msra.mxu0 %v1149
    %1196 = vmatprep.subr.mxu0 %v1152
    %1197 = vmatpush1.msra.mxu0 %v1151
    %1198 = vmatprep.subr.mxu0 0.0
    %1199 = vmatpush1.msra.mxu0 0.0
    %1200 = vmatprep.subr.mxu0 0.0
    %1201 = vmatpush1.msra.mxu0 0.0
    %1202 = vmatprep.subr.mxu0 0.0
    %1203 = vmatpush1.msra.mxu0 0.0
    %1204 = vmatprep.subr.mxu0 0.0
    %1205 = vmatpush1.msra.mxu0 0.0
    %1206 = vmatprep.subr.mxu0 0.0
    %1207 = vmatpush1.msra.mxu0 0.0
    %1208 = vmatprep.subr.mxu0 0.0
    %1209 = vmatpush1.msra.mxu0 0.0
    %1210 = vmatprep.subr.mxu0 0.0
    %1211 = vmatpush1.msra.mxu0 0.0
    %1212 = vmatprep.subr.mxu0 0.0
    %1213 = vmatpush1.msra.mxu0 0.0
    %1214 = vmatprep.subr.mxu0 0.0
    %1215 = vmatpush1.msra.mxu0 0.0
    %1216 = vmatprep.subr.mxu0 0.0
    %1217 = vmatpush1.msra.mxu0 0.0
    %1218 = vmatprep.subr.mxu0 0.0
    %1219 = vmatpush1.msra.mxu0 0.0
    %1220 = vmatprep.subr.mxu0 0.0
    %1221 = vmatpush1.msra.mxu0 0.0
    %1222 = vmatprep.subr.mxu0 0.0
    %1223 = vmatpush1.msra.mxu0 0.0
    %1224 = vmatprep.subr.mxu0 0.0
    %1225 = vmatpush1.msra.mxu0 0.0
    %1226 = vmatprep.subr.mxu0 0.0
    %1227 = vmatpush1.msra.mxu0 0.0
    %1228 = vmatprep.subr.mxu0 0.0
    %1229 = vmatpush1.msra.mxu0 0.0
    %1230 = vmatprep.mubr.f32.mxu0 0.0
    %1231 = vmatmul.mubr.f32.gmra.mrb[0].mxu0 %v1119
    %v1232 = vpop.f32.mrb[0].mxu0
    %v1233 = vadd.f32 %v1159, %v1232
    %v1234 = vpop.f32.mrb[0].mxu0
    %v1235 = vadd.f32 %v1163, %v1234
    %1236 = vdwg.mxu0
    %v1237 = vmax.f32 %v1233, 0.0
    %v1238 = vmax.f32 %v1235, 0.0
    %s1239 = scalar_lea.vmem [#allocation10], 256
    %v1240 = vld [vmem:[%s1239] sm:$0xff]
    %v1241 = vld [vmem:[%s1239 + $0x8] sm:$0xff]
    %v1242 = vld [vmem:[%s1239 + $0x10] sm:$0xff]
    %v1243 = vld [vmem:[%s1239 + $0x18] sm:$0xff]
    %v1244 = vld [vmem:[%s1239 + $0x20] sm:$0xff]
    %v1245 = vld [vmem:[%s1239 + $0x28] sm:$0xff]
    %v1246 = vld [vmem:[%s1239 + $0x30] sm:$0xff]
    %v1247 = vld [vmem:[%s1239 + $0x38] sm:$0xff]
    %v1248 = vld [vmem:[%s1239 + $0x40] sm:$0xff]
    %v1249 = vld [vmem:[%s1239 + $0x48] sm:$0xff]
    %v1250 = vld [vmem:[%s1239 + $0x50] sm:$0xff]
    %v1251 = vld [vmem:[%s1239 + $0x58] sm:$0xff]
    %v1252 = vld [vmem:[%s1239 + $0x60] sm:$0xff]
    %v1253 = vld [vmem:[%s1239 + $0x68] sm:$0xff]
    %v1254 = vld [vmem:[%s1239 + $0x70] sm:$0xff]
    %v1255 = vld [vmem:[%s1239 + $0x78] sm:$0xff]
    %v1256 = vld [vmem:[%s1239 + $0x80] sm:$0xff]
    %v1257 = vld [vmem:[%s1239 + $0x88] sm:$0xff]
    %v1258 = vld [vmem:[%s1239 + $0x90] sm:$0xff]
    %v1259 = vld [vmem:[%s1239 + $0x98] sm:$0xff]
    %v1260 = vld [vmem:[%s1239 + $0xa0] sm:$0xff]
    %v1261 = vld [vmem:[%s1239 + $0xa8] sm:$0xff]
    %v1262 = vld [vmem:[%s1239 + $0xb0] sm:$0xff]
    %v1263 = vld [vmem:[%s1239 + $0xb8] sm:$0xff]
    %v1264 = vld [vmem:[%s1239 + $0xc0] sm:$0xff]
    %v1265 = vld [vmem:[%s1239 + $0xc8] sm:$0xff]
    %v1266 = vld [vmem:[%s1239 + $0xd0] sm:$0xff]
    %v1267 = vld [vmem:[%s1239 + $0xd8] sm:$0xff]
    %v1268 = vld [vmem:[%s1239 + $0xe0] sm:$0xff]
    %v1269 = vld [vmem:[%s1239 + $0xe8] sm:$0xff]
    %v1270 = vld [vmem:[%s1239 + $0xf0] sm:$0xff]
    %v1271 = vld [vmem:[%s1239 + $0xf8] sm:$0xff]
    %s1272 = scalar_lea.vmem %s10, 1
    %v1273 = vld [vmem:[%s1272] sm:$0x1]
    %v1275 = vlaneseq
    %v1276 = vshrl.u32 %v1275, 7
    %v1277 = vsub.s32 0, %v1276
    %v1278 = vrot.slane %v1273, %v1277
    %1280 = vmatprep.subr.mxu0 0.0
    %1281 = vmatpush1.msra.mxu0 %v1240
    %1282 = vmatprep.subr.mxu0 0.0
    %1283 = vmatpush1.msra.mxu0 %v1241
    %1284 = vmatprep.subr.mxu0 0.0
    %1285 = vmatpush1.msra.mxu0 %v1242
    %1286 = vmatprep.subr.mxu0 0.0
    %1287 = vmatpush1.msra.mxu0 %v1243
    %1288 = vmatprep.subr.mxu0 0.0
    %1289 = vmatpush1.msra.mxu0 %v1244
    %1290 = vmatprep.subr.mxu0 0.0
    %1291 = vmatpush1.msra.mxu0 %v1245
    %1292 = vmatprep.subr.mxu0 0.0
    %1293 = vmatpush1.msra.mxu0 %v1246
    %1294 = vmatprep.subr.mxu0 0.0
    %1295 = vmatpush1.msra.mxu0 %v1247
    %1296 = vmatprep.subr.mxu0 0.0
    %1297 = vmatpush1.msra.mxu0 %v1248
    %1298 = vmatprep.subr.mxu0 0.0
    %1299 = vmatpush1.msra.mxu0 %v1249
    %1300 = vmatprep.subr.mxu0 0.0
    %1301 = vmatpush1.msra.mxu0 %v1250
    %1302 = vmatprep.subr.mxu0 0.0
    %1303 = vmatpush1.msra.mxu0 %v1251
    %1304 = vmatprep.subr.mxu0 0.0
    %1305 = vmatpush1.msra.mxu0 %v1252
    %1306 = vmatprep.subr.mxu0 0.0
    %1307 = vmatpush1.msra.mxu0 %v1253
    %1308 = vmatprep.subr.mxu0 0.0
    %1309 = vmatpush1.msra.mxu0 %v1254
    %1310 = vmatprep.subr.mxu0 0.0
    %1311 = vmatpush1.msra.mxu0 %v1255
    %1312 = vmatprep.subr.mxu0 0.0
    %1313 = vmatpush1.msra.mxu0 %v1256
    %1314 = vmatprep.subr.mxu0 0.0
    %1315 = vmatpush1.msra.mxu0 %v1257
    %1316 = vmatprep.subr.mxu0 0.0
    %1317 = vmatpush1.msra.mxu0 %v1258
    %1318 = vmatprep.subr.mxu0 0.0
    %1319 = vmatpush1.msra.mxu0 %v1259
    %1320 = vmatprep.subr.mxu0 0.0
    %1321 = vmatpush1.msra.mxu0 %v1260
    %1322 = vmatprep.subr.mxu0 0.0
    %1323 = vmatpush1.msra.mxu0 %v1261
    %1324 = vmatprep.subr.mxu0 0.0
    %1325 = vmatpush1.msra.mxu0 %v1262
    %1326 = vmatprep.subr.mxu0 0.0
    %1327 = vmatpush1.msra.mxu0 %v1263
    %1328 = vmatprep.subr.mxu0 0.0
    %1329 = vmatpush1.msra.mxu0 %v1264
    %1330 = vmatprep.subr.mxu0 0.0
    %1331 = vmatpush1.msra.mxu0 %v1265
    %1332 = vmatprep.subr.mxu0 0.0
    %1333 = vmatpush1.msra.mxu0 %v1266
    %1334 = vmatprep.subr.mxu0 0.0
    %1335 = vmatpush1.msra.mxu0 %v1267
    %1336 = vmatprep.subr.mxu0 0.0
    %1337 = vmatpush1.msra.mxu0 %v1268
    %1338 = vmatprep.subr.mxu0 0.0
    %1339 = vmatpush1.msra.mxu0 %v1269
    %1340 = vmatprep.subr.mxu0 0.0
    %1341 = vmatpush1.msra.mxu0 %v1270
    %1342 = vmatprep.subr.mxu0 0.0
    %1343 = vmatpush1.msra.mxu0 %v1271
    %1344 = vmatprep.mubr.f32.mxu0 %v1238
    %1345 = vmatmul.mubr.f32.gmra.mrb[0].mxu0 %v1237
    %v1346 = vpop.f32.mrb[0].mxu0
    %v1347 = vadd.f32 %v1278, %v1346
    %v1348 = vpop.f32.mrb[0].mxu0
    %1349 = vdwg.mxu0
    %v1350 = vadd.f32 %v1119, %v1347
    %s1351 = scalar_lea.vmem %s11, 1
    %v1352 = vld [vmem:[%s1351] sm:$0x1]
    %s1353 = scalar_lea.vmem %s12, 1
    %v1354 = vld [vmem:[%s1353] sm:$0x1]
    %1355 = vmatprep.subr.mxu0 0.0
    %1356 = vmatpush1.msra.mxu0 0.0078125
    %1357 = vmatprep.subr.mxu0 0.0
    %1358 = vmatpush1.msra.mxu0 0.0078125
    %1359 = vmatprep.subr.mxu0 0.0
    %1360 = vmatpush1.msra.mxu0 0.0078125
    %1361 = vmatprep.subr.mxu0 0.0
    %1362 = vmatpush1.msra.mxu0 0.0078125
    %1363 = vmatprep.subr.mxu0 0.0
    %1364 = vmatpush1.msra.mxu0 0.0078125
    %1365 = vmatprep.subr.mxu0 0.0
    %1366 = vmatpush1.msra.mxu0 0.0078125
    %1367 = vmatprep.subr.mxu0 0.0
    %1368 = vmatpush1.msra.mxu0 0.0078125
    %1369 = vmatprep.subr.mxu0 0.0
    %1370 = vmatpush1.msra.mxu0 0.0078125
    %1371 = vmatprep.subr.mxu0 0.0
    %1372 = vmatpush1.msra.mxu0 0.0078125
    %1373 = vmatprep.subr.mxu0 0.0
    %1374 = vmatpush1.msra.mxu0 0.0078125
    %1375 = vmatprep.subr.mxu0 0.0
    %1376 = vmatpush1.msra.mxu0 0.0078125
    %1377 = vmatprep.subr.mxu0 0.0
    %1378 = vmatpush1.msra.mxu0 0.0078125
    %1379 = vmatprep.subr.mxu0 0.0
    %1380 = vmatpush1.msra.mxu0 0.0078125
    %1381 = vmatprep.subr.mxu0 0.0
    %1382 = vmatpush1.msra.mxu0 0.0078125
    %1383 = vmatprep.subr.mxu0 0.0
    %1384 = vmatpush1.msra.mxu0 0.0078125
    %1385 = vmatprep.subr.mxu0 0.0
    %1386 = vmatpush1.msra.mxu0 0.0078125
    %1387 = vmatprep.subr.mxu0 0.0
    %1388 = vmatpush1.msra.mxu0 0.0
    %1389 = vmatprep.subr.mxu0 0.0
    %1390 = vmatpush1.msra.mxu0 0.0
    %1391 = vmatprep.subr.mxu0 0.0
    %1392 = vmatpush1.msra.mxu0 0.0
    %1393 = vmatprep.subr.mxu0 0.0
    %1394 = vmatpush1.msra.mxu0 0.0
    %1395 = vmatprep.subr.mxu0 0.0
    %1396 = vmatpush1.msra.mxu0 0.0
    %1397 = vmatprep.subr.mxu0 0.0
    %1398 = vmatpush1.msra.mxu0 0.0
    %1399 = vmatprep.subr.mxu0 0.0
    %1400 = vmatpush1.msra.mxu0 0.0
    %1401 = vmatprep.subr.mxu0 0.0
    %1402 = vmatpush1.msra.mxu0 0.0
    %1403 = vmatprep.subr.mxu0 0.0
    %1404 = vmatpush1.msra.mxu0 0.0
    %1405 = vmatprep.subr.mxu0 0.0
    %1406 = vmatpush1.msra.mxu0 0.0
    %1407 = vmatprep.subr.mxu0 0.0
    %1408 = vmatpush1.msra.mxu0 0.0
    %1409 = vmatprep.subr.mxu0 0.0
    %1410 = vmatpush1.msra.mxu0 0.0
    %1411 = vmatprep.subr.mxu0 0.0
    %1412 = vmatpush1.msra.mxu0 0.0
    %1413 = vmatprep.subr.mxu0 0.0
    %1414 = vmatpush1.msra.mxu0 0.0
    %1415 = vmatprep.subr.mxu0 0.0
    %1416 = vmatpush1.msra.mxu0 0.0
    %1417 = vmatprep.subr.mxu0 0.0
    %1418 = vmatpush1.msra.mxu0 0.0
    %1419 = vmatprep.mubr.f32.mxu0 0.0
    %1420 = vmatmul.mubr.f32.gmra.mrb[0].mxu0 %v1350
    %v1421 = vpop.f32.mrb[0].mxu0
    %v1422 = vadd.f32 0.0, %v1421
    %v1423 = vpop.f32.mrb[0].mxu0
    %1424 = vdwg.mxu0
    %v1425 = vsub.f32 %v1350, %v1422
    %v1426 = vmul.f32 %v1425, %v1425
    %1427 = vmatprep.subr.mxu0 0.0
    %1428 = vmatpush1.msra.mxu0 0.0078125
    %1429 = vmatprep.subr.mxu0 0.0
    %1430 = vmatpush1.msra.mxu0 0.0078125
    %1431 = vmatprep.subr.mxu0 0.0
    %1432 = vmatpush1.msra.mxu0 0.0078125
    %1433 = vmatprep.subr.mxu0 0.0
    %1434 = vmatpush1.msra.mxu0 0.0078125
    %1435 = vmatprep.subr.mxu0 0.0
    %1436 = vmatpush1.msra.mxu0 0.0078125
    %1437 = vmatprep.subr.mxu0 0.0
    %1438 = vmatpush1.msra.mxu0 0.0078125
    %1439 = vmatprep.subr.mxu0 0.0
    %1440 = vmatpush1.msra.mxu0 0.0078125
    %1441 = vmatprep.subr.mxu0 0.0
    %1442 = vmatpush1.msra.mxu0 0.0078125
    %1443 = vmatprep.subr.mxu0 0.0
    %1444 = vmatpush1.msra.mxu0 0.0078125
    %1445 = vmatprep.subr.mxu0 0.0
    %1446 = vmatpush1.msra.mxu0 0.0078125
    %1447 = vmatprep.subr.mxu0 0.0
    %1448 = vmatpush1.msra.mxu0 0.0078125
    %1449 = vmatprep.subr.mxu0 0.0
    %1450 = vmatpush1.msra.mxu0 0.0078125
    %1451 = vmatprep.subr.mxu0 0.0
    %1452 = vmatpush1.msra.mxu0 0.0078125
    %1453 = vmatprep.subr.mxu0 0.0
    %1454 = vmatpush1.msra.mxu0 0.0078125
    %1455 = vmatprep.subr.mxu0 0.0
    %1456 = vmatpush1.msra.mxu0 0.0078125
    %1457 = vmatprep.subr.mxu0 0.0
    %1458 = vmatpush1.msra.mxu0 0.0078125
    %1459 = vmatprep.subr.mxu0 0.0
    %1460 = vmatpush1.msra.mxu0 0.0
    %1461 = vmatprep.subr.mxu0 0.0
    %1462 = vmatpush1.msra.mxu0 0.0
    %1463 = vmatprep.subr.mxu0 0.0
    %1464 = vmatpush1.msra.mxu0 0.0
    %1465 = vmatprep.subr.mxu0 0.0
    %1466 = vmatpush1.msra.mxu0 0.0
    %1467 = vmatprep.subr.mxu0 0.0
    %1468 = vmatpush1.msra.mxu0 0.0
    %1469 = vmatprep.subr.mxu0 0.0
    %1470 = vmatpush1.msra.mxu0 0.0
    %1471 = vmatprep.subr.mxu0 0.0
    %1472 = vmatpush1.msra.mxu0 0.0
    %1473 = vmatprep.subr.mxu0 0.0
    %1474 = vmatpush1.msra.mxu0 0.0
    %1475 = vmatprep.subr.mxu0 0.0
    %1476 = vmatpush1.msra.mxu0 0.0
    %1477 = vmatprep.subr.mxu0 0.0
    %1478 = vmatpush1.msra.mxu0 0.0
    %1479 = vmatprep.subr.mxu0 0.0
    %1480 = vmatpush1.msra.mxu0 0.0
    %1481 = vmatprep.subr.mxu0 0.0
    %1482 = vmatpush1.msra.mxu0 0.0
    %1483 = vmatprep.subr.mxu0 0.0
    %1484 = vmatpush1.msra.mxu0 0.0
    %1485 = vmatprep.subr.mxu0 0.0
    %1486 = vmatpush1.msra.mxu0 0.0
    %1487 = vmatprep.subr.mxu0 0.0
    %1488 = vmatpush1.msra.mxu0 0.0
    %1489 = vmatprep.subr.mxu0 0.0
    %1490 = vmatpush1.msra.mxu0 0.0
    %1491 = vmatprep.mubr.f32.mxu0 0.0
    %1492 = vmatmul.mubr.f32.gmra.mrb[0].mxu0 %v1426
    %v1493 = vpop.f32.mrb[0].mxu0
    %v1494 = vadd.f32 1e-05, %v1493
    %v1495 = vpop.f32.mrb[0].mxu0
    %1496 = vdwg.mxu0
    %v1497 = vrsqrt.pop %v1494
    %v1498 = vmul.f32 %v1425, %v1497
    %v1500 = vlaneseq
    %v1501 = vshrl.u32 %v1500, 7
    %v1502 = vsub.s32 0, %v1501
    %v1503 = vrot.slane %v1352, %v1502
    %v1505 = vmul.f32 %v1498, %v1503
    %v1507 = vlaneseq
    %v1508 = vshrl.u32 %v1507, 7
    %v1509 = vsub.s32 0, %v1508
    %v1510 = vrot.slane %v1354, %v1509
    %v1512 = vadd.f32 %v1505, %v1510
    %v1513 = vld [vmem:[#allocation11] sm:$0xff]
    %v1514 = vld [vmem:[#allocation11 + $0x8] sm:$0xff]
    %v1515 = vld [vmem:[#allocation11 + $0x10] sm:$0xff]
    %v1516 = vld [vmem:[#allocation11 + $0x18] sm:$0xff]
    %v1517 = vld [vmem:[#allocation11 + $0x20] sm:$0xff]
    %v1518 = vld [vmem:[#allocation11 + $0x28] sm:$0xff]
    %v1519 = vld [vmem:[#allocation11 + $0x30] sm:$0xff]
    %v1520 = vld [vmem:[#allocation11 + $0x38] sm:$0xff]
    %v1521 = vld [vmem:[#allocation11 + $0x40] sm:$0xff]
    %v1522 = vld [vmem:[#allocation11 + $0x48] sm:$0xff]
    %v1523 = vld [vmem:[#allocation11 + $0x50] sm:$0xff]
    %v1524 = vld [vmem:[#allocation11 + $0x58] sm:$0xff]
    %v1525 = vld [vmem:[#allocation11 + $0x60] sm:$0xff]
    %v1526 = vld [vmem:[#allocation11 + $0x68] sm:$0xff]
    %v1527 = vld [vmem:[#allocation11 + $0x70] sm:$0xff]
    %v1528 = vld [vmem:[#allocation11 + $0x78] sm:$0xff]
    %v1529 = vld [vmem:[%s14] sm:$0x1]
    %v1531 = vlaneseq
    %v1532 = vshrl.u32 %v1531, 7
    %v1533 = vsub.s32 0, %v1532
    %v1534 = vrot.slane %v1529, %v1533
    %1536 = vmatprep.subr.mxu0 0.0
    %1537 = vmatpush1.msra.mxu0 %v1513
    %1538 = vmatprep.subr.mxu0 0.0
    %1539 = vmatpush1.msra.mxu0 %v1514
    %1540 = vmatprep.subr.mxu0 0.0
    %1541 = vmatpush1.msra.mxu0 %v1515
    %1542 = vmatprep.subr.mxu0 0.0
    %1543 = vmatpush1.msra.mxu0 %v1516
    %1544 = vmatprep.subr.mxu0 0.0
    %1545 = vmatpush1.msra.mxu0 %v1517
    %1546 = vmatprep.subr.mxu0 0.0
    %1547 = vmatpush1.msra.mxu0 %v1518
    %1548 = vmatprep.subr.mxu0 0.0
    %1549 = vmatpush1.msra.mxu0 %v1519
    %1550 = vmatprep.subr.mxu0 0.0
    %1551 = vmatpush1.msra.mxu0 %v1520
    %1552 = vmatprep.subr.mxu0 0.0
    %1553 = vmatpush1.msra.mxu0 %v1521
    %1554 = vmatprep.subr.mxu0 0.0
    %1555 = vmatpush1.msra.mxu0 %v1522
    %1556 = vmatprep.subr.mxu0 0.0
    %1557 = vmatpush1.msra.mxu0 %v1523
    %1558 = vmatprep.subr.mxu0 0.0
    %1559 = vmatpush1.msra.mxu0 %v1524
    %1560 = vmatprep.subr.mxu0 0.0
    %1561 = vmatpush1.msra.mxu0 %v1525
    %1562 = vmatprep.subr.mxu0 0.0
    %1563 = vmatpush1.msra.mxu0 %v1526
    %1564 = vmatprep.subr.mxu0 0.0
    %1565 = vmatpush1.msra.mxu0 %v1527
    %1566 = vmatprep.subr.mxu0 0.0
    %1567 = vmatpush1.msra.mxu0 %v1528
    %1568 = vmatprep.subr.mxu0 0.0
    %1569 = vmatpush1.msra.mxu0 0.0
    %1570 = vmatprep.subr.mxu0 0.0
    %1571 = vmatpush1.msra.mxu0 0.0
    %1572 = vmatprep.subr.mxu0 0.0
    %1573 = vmatpush1.msra.mxu0 0.0
    %1574 = vmatprep.subr.mxu0 0.0
    %1575 = vmatpush1.msra.mxu0 0.0
    %1576 = vmatprep.subr.mxu0 0.0
    %1577 = vmatpush1.msra.mxu0 0.0
    %1578 = vmatprep.subr.mxu0 0.0
    %1579 = vmatpush1.msra.mxu0 0.0
    %1580 = vmatprep.subr.mxu0 0.0
    %1581 = vmatpush1.msra.mxu0 0.0
    %1582 = vmatprep.subr.mxu0 0.0
    %1583 = vmatpush1.msra.mxu0 0.0
    %1584 = vmatprep.subr.mxu0 0.0
    %1585 = vmatpush1.msra.mxu0 0.0
    %1586 = vmatprep.subr.mxu0 0.0
    %1587 = vmatpush1.msra.mxu0 0.0
    %1588 = vmatprep.subr.mxu0 0.0
    %1589 = vmatpush1.msra.mxu0 0.0
    %1590 = vmatprep.subr.mxu0 0.0
    %1591 = vmatpush1.msra.mxu0 0.0
    %1592 = vmatprep.subr.mxu0 0.0
    %1593 = vmatpush1.msra.mxu0 0.0
    %1594 = vmatprep.subr.mxu0 0.0
    %1595 = vmatpush1.msra.mxu0 0.0
    %1596 = vmatprep.subr.mxu0 0.0
    %1597 = vmatpush1.msra.mxu0 0.0
    %1598 = vmatprep.subr.mxu0 0.0
    %1599 = vmatpush1.msra.mxu0 0.0
    %1600 = vmatprep.mubr.f32.mxu0 0.0
    %1601 = vmatmul.mubr.f32.gmra.mrb[0].mxu0 %v1512
    %v1602 = vpop.f32.mrb[0].mxu0
    %v1603 = vadd.f32 %v1534, %v1602
    %v1604 = vpop.f32.mrb[0].mxu0
    %1605 = vdwg.mxu0
    %v1606 = vmax.f32 %v1603, 0.0
    %v1607 = vld [vmem:[%s15] sm:$0x1]
    %v1609 = vlaneseq
    %v1610 = vshrl.u32 %v1609, 7
    %v1611 = vsub.s32 0, %v1610
    %v1612 = vrot.slane %v1607, %v1611
    %v1614 = vmul.f32 %v1606, %v1612
    %vm1615 = vcmask 1041408
    %v1616 = vsel %vm1615, %v1614, 0.0
    %1617 = vadd.xlane.f32.xlu0 %v1616
    %v1618 = vpop.xlane.xlu0 %1617
    %s1619 = sld [smem:[#allocation2]]
    %v1620 = vstv %s1619
    %v1621 = vadd.f32 %v1618, %v1620
    %vm1622 = vcmask 1024
    %1623 = vst.msk [vmem:[%s17] sm:$0x3] %vm1622, %v1621
    // Predicated region
    $region94: #{tpu_custom_call.1} parent=1 // pred_check
      _
    $region95: #{tpu_custom_call.1} parent=1 // pred_check_branch
      %1625 = sbr.rel (0) target = $region97
    $region96: #{tpu_custom_call.1} parent=1 // pred_region
      _
    $region97: #{tpu_custom_call.1} parent=1 // pred_fallthru
      _
    // Predicated region
    $region98: #{tpu_custom_call.1} parent=1 // pred_check
      _
    $region99: #{tpu_custom_call.1} parent=1 // pred_check_branch
      %1627 = sbr.rel (0) target = $region101
    $region100: #{tpu_custom_call.1} parent=1 // pred_region
      _
    $region101: #{tpu_custom_call.1} parent=1 // pred_fallthru
      _
    %1628 = vsyncpa [#allocation4], 1
    %1629 = vsyncpa [#allocation6], 1
    %1630 = vsyncpa [#allocation9], 1
    %1631 = vsyncpa [#allocation12], 1

</llo_original>
